<compile_context>
chip_gen: v6e
topology: v6e:2x2x1
jax: 0.10.0
libtpu: 0.0.40
codegen_flags: <defaults>
</compile_context>

<pallas_src>
import functools
import math

import jax
import jax.numpy as jnp
from jax.experimental import pallas as pl
from jax.experimental.pallas import tpu as pltpu

_LOG2 = math.log(2.0)
_LANE = 128     # TPU lane width
_SUBLANE = 8    # TPU sublane width


def _round_up(x, m):
    return (x + m - 1) // m * m


def _resident_spec(shape):
    """BlockSpec for a block that is identical at every grid step.

    Single-buffered: the block never changes, so double-buffering it would
    only double its VMEM footprint without hiding any DMA.
    """
    index_map = lambda i: (0,) * len(shape)
    try:
        return pl.BlockSpec(shape, index_map, pipeline_mode=pl.Buffered(1))
    except Exception:  # older jax without pipeline_mode / Buffered
        return pl.BlockSpec(shape, index_map)


# ---------------------------------------------------------------------------
# Fused Pallas kernel: the whole Dense chain on one row tile of activations.
#   refs = (x_ref, w0, b0, w1, b1, ..., w_{L-1}, b_{L-1}, o_ref)
#   acts = static tuple of per-layer activation flags
# ---------------------------------------------------------------------------
def _fused_mlp_kernel(*refs, acts):
    x_ref = refs[0]
    o_ref = refs[-1]
    wb = refs[1:-1]

    h = x_ref[...]                 # (TM, F0_pad) bf16 (cast once in wrapper)
    n_layers = len(acts)
    for li, apply_act in enumerate(acts):
        w = wb[2 * li][...]        # (K_pad, M_pad) bf16
        b = wb[2 * li + 1][...]    # (1, M_pad)     f32
        # bf16 inputs, f32 accumulation on the MXU.
        y = jnp.dot(h, w, preferred_element_type=jnp.float32)
        y = y + b
        if apply_act:
            # shifted softplus: ssp(x) = softplus(x) - ln(2)
            y = jax.nn.softplus(y) - _LOG2
        # Keep a single bf16 copy of h for the next matmul; the last layer's
        # result stays in f32 for the output store.
        h = y.astype(jnp.bfloat16) if li + 1 < n_layers else y
    o_ref[...] = h.astype(o_ref.dtype)


# ---------------------------------------------------------------------------
# One-time parameter preprocessing (hoisted out of the forward pass).
# ---------------------------------------------------------------------------
def prepare_dynamic_unet_params(params):
    """Pad weights/biases to 128-lane multiples and cast weights to bf16.

    params: list of (w, b, apply_act) with w of shape (in, out) f32.
    Returns a dict consumed by dynamic_unet_forward.
    """
    prep_w, prep_b, acts, dims = [], [], [], []
    prev_out = params[0][0].shape[0]
    for w, b, apply_act in params:
        K, M = w.shape
        # Compare *unpadded* widths so a real mismatch can't hide behind padding.
        assert K == prev_out, f"layer width chain mismatch: {K} vs {prev_out}"
        k_pad = _round_up(K, _LANE)
        m_pad = _round_up(M, _LANE)
        w_pad = (jnp.zeros((k_pad, m_pad), jnp.float32)
                 .at[:K, :M].set(w).astype(jnp.bfloat16))
        b_pad = jnp.zeros((1, m_pad), jnp.float32).at[0, :M].set(b)
        prep_w.append(w_pad)
        prep_b.append(b_pad)
        acts.append(bool(apply_act))
        dims.append((K, M, k_pad, m_pad))
        prev_out = M
    return {
        "weights": prep_w,
        "biases": prep_b,
        "acts": tuple(acts),
        "dims": tuple(dims),
        "f_in": params[0][0].shape[0],
        "f_out": params[-1][0].shape[1],
    }


def _pick_tm(n_rows, widest_m_pad, tm):
    """Adaptive row-tile size."""
    if tm is not None:
        return tm
    if n_rows <= _LANE:
        # Small inputs: one tile, just big enough (multiple of 8 sublanes),
        # avoids computing on ~90% padding rows.
        return max(_SUBLANE, _round_up(n_rows, _SUBLANE))
    # Large inputs: 256-512 row tiles amortize the ~0.35 us/step grid overhead
    # and fill the 256-wide MXU, but bound the live activation tile
    # (~6 B/elem for the f32 temp + bf16 copy of h) to ~3 MiB.
    budget = 3 << 20
    cap = max(_LANE, (budget // (widest_m_pad * 6)) // _LANE * _LANE)
    tm = min(512, cap)
    # Prefer >= 2 grid steps so the "parallel" axis can shard across v7x's two
    # TensorCores (no-op on single-TC v5e/v6e).
    while tm > _LANE and -(-n_rows // tm) < 2:
        tm //= 2
    return tm


# ---------------------------------------------------------------------------
# Forward pass: pad x, build specs, run one fused pallas_call.
# ---------------------------------------------------------------------------
def dynamic_unet_forward(x, prepared, tm=None):
    """Apply the full DynamicUNet Dense chain in a single fused Pallas kernel.

    x:        (N, F) float32 activations.
    prepared: output of prepare_dynamic_unet_params().
    """
    N, F = x.shape
    assert F == prepared["f_in"], (F, prepared["f_in"])
    dims = prepared["dims"]
    acts = prepared["acts"]
    weights = prepared["weights"]
    biases = prepared["biases"]

    f_in_pad = dims[0][2]
    f_out_pad = dims[-1][3]
    widest_m_pad = max(d[3] for d in dims)

    tm = _pick_tm(N, widest_m_pad, tm)
    n_pad = _round_up(N, tm)

    # Zero-pad rows/lanes and cast once to bf16 (halves activation input DMA;
    # extra rows/lanes are trimmed at the end).
    x_pad = (jnp.zeros((n_pad, f_in_pad), jnp.float32)
             .at[:N, :F].set(x).astype(jnp.bfloat16))

    kernel_inputs = [x_pad]
    in_specs = [pl.BlockSpec((tm, f_in_pad), lambda i: (i, 0))]
    for (_, _, k_pad, m_pad), w_pad, b_pad in zip(dims, weights, biases):
        kernel_inputs += [w_pad, b_pad]
        # Constant index_map + single buffer: DMA'd to VMEM once, resident
        # across all row tiles.
        in_specs += [_resident_spec((k_pad, m_pad)),
                     _resident_spec((1, m_pad))]

    # --- VMEM budget from the actual resident footprint ---------------------
    weight_bytes = sum(k * m * 2 + m * 4 for (_, _, k, m) in dims)  # bf16 W + f32 b
    act_bytes = (2 * tm * f_in_pad * 2          # double-buffered bf16 input tile
                 + 2 * tm * f_out_pad * 4       # double-buffered f32 output tile
                 + tm * widest_m_pad * 6)       # f32 temp + bf16 copy of h
    needed = weight_bytes + act_bytes
    try:
        phys_vmem = pltpu.get_tpu_info().vmem_capacity_bytes
    except Exception:
        phys_vmem = 64 << 20  # conservative: v7x has the smallest VMEM per TC
    cap = int(phys_vmem * 0.85)
    vmem_limit = min(max(needed + (8 << 20), 32 << 20), cap)
    # TODO(synk): if `needed > cap` (very wide layers, e.g. n_atom_basis >= 1024
    # on v7x's 64 MiB VMEM), the widest layers should be streamed with a
    # K-contraction grid axis + f32 VMEM accumulator instead of held resident.

    grid = (n_pad // tm,)

    # Advisory cost estimate for the XLA scheduler.
    flops = 2 * n_pad * sum(k * m for (_, _, k, m) in dims)
    transcendentals = 2 * n_pad * sum(
        m for (_, _, _, m), a in zip(dims, acts) if a)   # exp + log per element
    bytes_accessed = (x_pad.size * 2
                      + sum(w.size * 2 + b.size * 4
                            for w, b in zip(weights, biases))
                      + n_pad * f_out_pad * 4)

    out = pl.pallas_call(
        functools.partial(_fused_mlp_kernel, acts=acts),
        out_shape=jax.ShapeDtypeStruct((n_pad, f_out_pad), jnp.float32),
        grid_spec=pltpu.PrefetchScalarGridSpec(
            num_scalar_prefetch=0,
            grid=grid,
            in_specs=in_specs,
            out_specs=pl.BlockSpec((tm, f_out_pad), lambda i: (i, 0)),
        ),
        compiler_params=pltpu.CompilerParams(
            dimension_semantics=("parallel",),
            vmem_limit_bytes=vmem_limit,
        ),
        cost_estimate=pl.CostEstimate(
            flops=flops,
            transcendentals=transcendentals,
            bytes_accessed=bytes_accessed,
        ),
    )(*kernel_inputs)

    return out[:N, :prepared["f_out"]]


# ---------------------------------------------------------------------------
# Parameter construction (deterministic, matches Dense.__init__ shapes)
# ---------------------------------------------------------------------------
def _xavier_uniform(key, fan_in, fan_out, dtype=jnp.float32):
    # torch.nn.init.xavier_uniform_ on W of shape (out, in):
    #   bound = sqrt(6 / (fan_in + fan_out)), uniform(-bound, bound).
    # We store the transpose (in, out); the distribution is symmetric.
    bound = math.sqrt(6.0 / (fan_in + fan_out))
    return jax.random.uniform(
        key, (fan_in, fan_out), dtype=dtype, minval=-bound, maxval=bound)


def make_dynamic_unet_params(key, n_atom_basis, layers):
    """Build weights/biases for encoder + decoder Dense stacks."""
    params = []  # list of (w, b, apply_act) in forward order
    nb = n_atom_basis
    # encoder: Dense(nb, 2nb, act) -> Dense(2nb, 2nb, None)
    for _ in range(layers):
        key, k1, k2 = jax.random.split(key, 3)
        params.append((_xavier_uniform(k1, nb, 2 * nb),
                       jnp.zeros((2 * nb,), jnp.float32), True))
        params.append((_xavier_uniform(k2, 2 * nb, 2 * nb),
                       jnp.zeros((2 * nb,), jnp.float32), False))
        nb *= 2
    # decoder: Dense(nb, nb//2, act) -> Dense(nb//2, nb//2, None)
    for _ in range(layers):
        key, k1, k2 = jax.random.split(key, 3)
        params.append((_xavier_uniform(k1, nb, nb // 2),
                       jnp.zeros((nb // 2,), jnp.float32), True))
        params.append((_xavier_uniform(k2, nb // 2, nb // 2),
                       jnp.zeros((nb // 2,), jnp.float32), False))
        nb //= 2
    return params


# ---------------------------------------------------------------------------
# Pure-JAX references for sanity checks
# ---------------------------------------------------------------------------
def dynamic_unet_reference(x, params, mimic_bf16=False):
    for w, b, apply_act in params:
        if mimic_bf16:
            y = jax.lax.dot(x.astype(jnp.bfloat16), w.astype(jnp.bfloat16),
                            preferred_element_type=jnp.float32)
        else:
            y = x @ w
        x = y + b
        if apply_act:
            x = jax.nn.softplus(x) - _LOG2
    return x


if __name__ == "__main__":
    # Small, module-consistent shapes: 16 "atoms" with 32 input features,
    # 2 encoder/decoder layers (feature path: 32->64->64->128->128->64->64->32->32).
    n_atoms = 16
    n_atom_basis = 32
    layers = 2

    key = jax.random.PRNGKey(0)
    kx, kp = jax.random.split(key)
    x = jax.random.normal(kx, (n_atoms, n_atom_basis), dtype=jnp.float32)
    raw_params = make_dynamic_unet_params(kp, n_atom_basis, layers)

    # One-time parameter prep (pad + bf16 cast), hoisted out of the forward.
    prepared = prepare_dynamic_unet_params(raw_params)

    out = dynamic_unet_forward(x, prepared)
    out = jax.block_until_ready(out)
    assert out.shape == (n_atoms, n_atom_basis), out.shape

    # Tight check against a reference doing the same bf16-matmul / f32-accum.
    ref_bf16 = dynamic_unet_reference(x, raw_params, mimic_bf16=True)
    assert jnp.allclose(out, ref_bf16, atol=1e-2, rtol=1e-2)

    # Loose sanity check against the full-f32 reference (bf16 quantization).
    ref_f32 = dynamic_unet_reference(x, raw_params, mimic_bf16=False)
    assert jnp.allclose(out, ref_f32, atol=1e-1, rtol=1e-1)

    print("KERNEL_OK")
</pallas_src>

<mosaic_0001>
module attributes {stable_mosaic.version = 11 : i64} {
  func.func @_fused_mlp_kernel(%arg0: i32, %arg1: memref<16x128xbf16, #tpu.memory_space<vmem>>, %arg2: memref<128x128xbf16, #tpu.memory_space<vmem>>, %arg3: memref<1x128xf32, #tpu.memory_space<vmem>>, %arg4: memref<128x128xbf16, #tpu.memory_space<vmem>>, %arg5: memref<1x128xf32, #tpu.memory_space<vmem>>, %arg6: memref<128x128xbf16, #tpu.memory_space<vmem>>, %arg7: memref<1x128xf32, #tpu.memory_space<vmem>>, %arg8: memref<128x128xbf16, #tpu.memory_space<vmem>>, %arg9: memref<1x128xf32, #tpu.memory_space<vmem>>, %arg10: memref<128x128xbf16, #tpu.memory_space<vmem>>, %arg11: memref<1x128xf32, #tpu.memory_space<vmem>>, %arg12: memref<128x128xbf16, #tpu.memory_space<vmem>>, %arg13: memref<1x128xf32, #tpu.memory_space<vmem>>, %arg14: memref<128x128xbf16, #tpu.memory_space<vmem>>, %arg15: memref<1x128xf32, #tpu.memory_space<vmem>>, %arg16: memref<128x128xbf16, #tpu.memory_space<vmem>>, %arg17: memref<1x128xf32, #tpu.memory_space<vmem>>, %arg18: memref<16x128xf32, #tpu.memory_space<vmem>>) attributes {dimension_semantics = [#tpu.dimension_semantics<parallel>], iteration_bounds = array<i64: 1>, scalar_prefetch = 0 : i64, scratch_operands = 0 : i64, tpu.core_type = #tpu.core_type<tc>, window_params = [{transform_indices = @transform_0, window_bounds = array<i64: 16, 128>}, {pipeline_mode = #tpu.pipeline_mode<synchronous>, transform_indices = @transform_1, window_bounds = array<i64: 128, 128>}, {pipeline_mode = #tpu.pipeline_mode<synchronous>, transform_indices = @transform_2, window_bounds = array<i64: 1, 128>}, {pipeline_mode = #tpu.pipeline_mode<synchronous>, transform_indices = @transform_3, window_bounds = array<i64: 128, 128>}, {pipeline_mode = #tpu.pipeline_mode<synchronous>, transform_indices = @transform_4, window_bounds = array<i64: 1, 128>}, {pipeline_mode = #tpu.pipeline_mode<synchronous>, transform_indices = @transform_5, window_bounds = array<i64: 128, 128>}, {pipeline_mode = #tpu.pipeline_mode<synchronous>, transform_indices = @transform_6, window_bounds = array<i64: 1, 128>}, {pipeline_mode = #tpu.pipeline_mode<synchronous>, transform_indices = @transform_7, window_bounds = array<i64: 128, 128>}, {pipeline_mode = #tpu.pipeline_mode<synchronous>, transform_indices = @transform_8, window_bounds = array<i64: 1, 128>}, {pipeline_mode = #tpu.pipeline_mode<synchronous>, transform_indices = @transform_9, window_bounds = array<i64: 128, 128>}, {pipeline_mode = #tpu.pipeline_mode<synchronous>, transform_indices = @transform_10, window_bounds = array<i64: 1, 128>}, {pipeline_mode = #tpu.pipeline_mode<synchronous>, transform_indices = @transform_11, window_bounds = array<i64: 128, 128>}, {pipeline_mode = #tpu.pipeline_mode<synchronous>, transform_indices = @transform_12, window_bounds = array<i64: 1, 128>}, {pipeline_mode = #tpu.pipeline_mode<synchronous>, transform_indices = @transform_13, window_bounds = array<i64: 128, 128>}, {pipeline_mode = #tpu.pipeline_mode<synchronous>, transform_indices = @transform_14, window_bounds = array<i64: 1, 128>}, {pipeline_mode = #tpu.pipeline_mode<synchronous>, transform_indices = @transform_15, window_bounds = array<i64: 128, 128>}, {pipeline_mode = #tpu.pipeline_mode<synchronous>, transform_indices = @transform_16, window_bounds = array<i64: 1, 128>}, {transform_indices = @transform_17, window_bounds = array<i64: 16, 128>}]} {
    %c0 = arith.constant 0 : index
    %c0_0 = arith.constant 0 : index
    %0 = vector.load %arg1[%c0, %c0_0] : memref<16x128xbf16, #tpu.memory_space<vmem>>, vector<16x128xbf16>
    %c0_1 = arith.constant 0 : index
    %c0_2 = arith.constant 0 : index
    %1 = vector.load %arg2[%c0_1, %c0_2] : memref<128x128xbf16, #tpu.memory_space<vmem>>, vector<128x128xbf16>
    %c0_3 = arith.constant 0 : index
    %c0_4 = arith.constant 0 : index
    %2 = vector.load %arg3[%c0_3, %c0_4] : memref<1x128xf32, #tpu.memory_space<vmem>>, vector<1x128xf32>
    %cst = arith.constant dense<0.000000e+00> : vector<16x128xf32>
    %3 = tpu.matmul %0, %1, %cst {dimension_numbers = #tpu.dot_dimension_numbers<[1], [0], [0], [1], [0, 0, 1, 1], [], []>} : vector<16x128xbf16>, vector<128x128xbf16>, vector<16x128xf32> -> vector<16x128xf32>
    %4 = vector.broadcast %2 : vector<1x128xf32> to vector<16x128xf32>
    %5 = arith.addf %3, %4 : vector<16x128xf32>
    %cst_5 = arith.constant 0.000000e+00 : f32
    %6 = vector.broadcast %cst_5 : f32 to vector<16x128xf32>
    %7 = arith.maximumf %5, %6 : vector<16x128xf32>
    %8 = vector.broadcast %cst_5 : f32 to vector<16x128xf32>
    %9 = arith.subf %5, %8 : vector<16x128xf32>
    %10 = arith.cmpf one, %9, %9 : vector<16x128xf32>
    %11 = vector.broadcast %cst_5 : f32 to vector<16x128xf32>
    %12 = arith.addf %5, %11 : vector<16x128xf32>
    %13 = math.absf %9 : vector<16x128xf32>
    %cst_6 = arith.constant 0.000000e+00 : f32
    %14 = vector.broadcast %cst_6 : f32 to vector<16x128xf32>
    %15 = arith.subf %14, %13 : vector<16x128xf32>
    %16 = math.exp %15 : vector<16x128xf32>
    %17 = math.log1p %16 : vector<16x128xf32>
    %18 = arith.addf %7, %17 : vector<16x128xf32>
    %19 = arith.select %10, %12, %18 : vector<16x128xi1>, vector<16x128xf32>
    %cst_7 = arith.constant 0.693147182 : f32
    %20 = vector.broadcast %cst_7 : f32 to vector<16x128xf32>
    %21 = arith.subf %19, %20 : vector<16x128xf32>
    %22 = arith.truncf %21 : vector<16x128xf32> to vector<16x128xbf16>
    %c0_8 = arith.constant 0 : index
    %c0_9 = arith.constant 0 : index
    %23 = vector.load %arg4[%c0_8, %c0_9] : memref<128x128xbf16, #tpu.memory_space<vmem>>, vector<128x128xbf16>
    %c0_10 = arith.constant 0 : index
    %c0_11 = arith.constant 0 : index
    %24 = vector.load %arg5[%c0_10, %c0_11] : memref<1x128xf32, #tpu.memory_space<vmem>>, vector<1x128xf32>
    %cst_12 = arith.constant dense<0.000000e+00> : vector<16x128xf32>
    %25 = tpu.matmul %22, %23, %cst_12 {dimension_numbers = #tpu.dot_dimension_numbers<[1], [0], [0], [1], [0, 0, 1, 1], [], []>} : vector<16x128xbf16>, vector<128x128xbf16>, vector<16x128xf32> -> vector<16x128xf32>
    %26 = vector.broadcast %24 : vector<1x128xf32> to vector<16x128xf32>
    %27 = arith.addf %25, %26 : vector<16x128xf32>
    %28 = arith.truncf %27 : vector<16x128xf32> to vector<16x128xbf16>
    %c0_13 = arith.constant 0 : index
    %c0_14 = arith.constant 0 : index
    %29 = vector.load %arg6[%c0_13, %c0_14] : memref<128x128xbf16, #tpu.memory_space<vmem>>, vector<128x128xbf16>
    %c0_15 = arith.constant 0 : index
    %c0_16 = arith.constant 0 : index
    %30 = vector.load %arg7[%c0_15, %c0_16] : memref<1x128xf32, #tpu.memory_space<vmem>>, vector<1x128xf32>
    %cst_17 = arith.constant dense<0.000000e+00> : vector<16x128xf32>
    %31 = tpu.matmul %28, %29, %cst_17 {dimension_numbers = #tpu.dot_dimension_numbers<[1], [0], [0], [1], [0, 0, 1, 1], [], []>} : vector<16x128xbf16>, vector<128x128xbf16>, vector<16x128xf32> -> vector<16x128xf32>
    %32 = vector.broadcast %30 : vector<1x128xf32> to vector<16x128xf32>
    %33 = arith.addf %31, %32 : vector<16x128xf32>
    %cst_18 = arith.constant 0.000000e+00 : f32
    %34 = vector.broadcast %cst_18 : f32 to vector<16x128xf32>
    %35 = arith.maximumf %33, %34 : vector<16x128xf32>
    %36 = vector.broadcast %cst_18 : f32 to vector<16x128xf32>
    %37 = arith.subf %33, %36 : vector<16x128xf32>
    %38 = arith.cmpf one, %37, %37 : vector<16x128xf32>
    %39 = vector.broadcast %cst_18 : f32 to vector<16x128xf32>
    %40 = arith.addf %33, %39 : vector<16x128xf32>
    %41 = math.absf %37 : vector<16x128xf32>
    %cst_19 = arith.constant 0.000000e+00 : f32
    %42 = vector.broadcast %cst_19 : f32 to vector<16x128xf32>
    %43 = arith.subf %42, %41 : vector<16x128xf32>
    %44 = math.exp %43 : vector<16x128xf32>
    %45 = math.log1p %44 : vector<16x128xf32>
    %46 = arith.addf %35, %45 : vector<16x128xf32>
    %47 = arith.select %38, %40, %46 : vector<16x128xi1>, vector<16x128xf32>
    %cst_20 = arith.constant 0.693147182 : f32
    %48 = vector.broadcast %cst_20 : f32 to vector<16x128xf32>
    %49 = arith.subf %47, %48 : vector<16x128xf32>
    %50 = arith.truncf %49 : vector<16x128xf32> to vector<16x128xbf16>
    %c0_21 = arith.constant 0 : index
    %c0_22 = arith.constant 0 : index
    %51 = vector.load %arg8[%c0_21, %c0_22] : memref<128x128xbf16, #tpu.memory_space<vmem>>, vector<128x128xbf16>
    %c0_23 = arith.constant 0 : index
    %c0_24 = arith.constant 0 : index
    %52 = vector.load %arg9[%c0_23, %c0_24] : memref<1x128xf32, #tpu.memory_space<vmem>>, vector<1x128xf32>
    %cst_25 = arith.constant dense<0.000000e+00> : vector<16x128xf32>
    %53 = tpu.matmul %50, %51, %cst_25 {dimension_numbers = #tpu.dot_dimension_numbers<[1], [0], [0], [1], [0, 0, 1, 1], [], []>} : vector<16x128xbf16>, vector<128x128xbf16>, vector<16x128xf32> -> vector<16x128xf32>
    %54 = vector.broadcast %52 : vector<1x128xf32> to vector<16x128xf32>
    %55 = arith.addf %53, %54 : vector<16x128xf32>
    %56 = arith.truncf %55 : vector<16x128xf32> to vector<16x128xbf16>
    %c0_26 = arith.constant 0 : index
    %c0_27 = arith.constant 0 : index
    %57 = vector.load %arg10[%c0_26, %c0_27] : memref<128x128xbf16, #tpu.memory_space<vmem>>, vector<128x128xbf16>
    %c0_28 = arith.constant 0 : index
    %c0_29 = arith.constant 0 : index
    %58 = vector.load %arg11[%c0_28, %c0_29] : memref<1x128xf32, #tpu.memory_space<vmem>>, vector<1x128xf32>
    %cst_30 = arith.constant dense<0.000000e+00> : vector<16x128xf32>
    %59 = tpu.matmul %56, %57, %cst_30 {dimension_numbers = #tpu.dot_dimension_numbers<[1], [0], [0], [1], [0, 0, 1, 1], [], []>} : vector<16x128xbf16>, vector<128x128xbf16>, vector<16x128xf32> -> vector<16x128xf32>
    %60 = vector.broadcast %58 : vector<1x128xf32> to vector<16x128xf32>
    %61 = arith.addf %59, %60 : vector<16x128xf32>
    %cst_31 = arith.constant 0.000000e+00 : f32
    %62 = vector.broadcast %cst_31 : f32 to vector<16x128xf32>
    %63 = arith.maximumf %61, %62 : vector<16x128xf32>
    %64 = vector.broadcast %cst_31 : f32 to vector<16x128xf32>
    %65 = arith.subf %61, %64 : vector<16x128xf32>
    %66 = arith.cmpf one, %65, %65 : vector<16x128xf32>
    %67 = vector.broadcast %cst_31 : f32 to vector<16x128xf32>
    %68 = arith.addf %61, %67 : vector<16x128xf32>
    %69 = math.absf %65 : vector<16x128xf32>
    %cst_32 = arith.constant 0.000000e+00 : f32
    %70 = vector.broadcast %cst_32 : f32 to vector<16x128xf32>
    %71 = arith.subf %70, %69 : vector<16x128xf32>
    %72 = math.exp %71 : vector<16x128xf32>
    %73 = math.log1p %72 : vector<16x128xf32>
    %74 = arith.addf %63, %73 : vector<16x128xf32>
    %75 = arith.select %66, %68, %74 : vector<16x128xi1>, vector<16x128xf32>
    %cst_33 = arith.constant 0.693147182 : f32
    %76 = vector.broadcast %cst_33 : f32 to vector<16x128xf32>
    %77 = arith.subf %75, %76 : vector<16x128xf32>
    %78 = arith.truncf %77 : vector<16x128xf32> to vector<16x128xbf16>
    %c0_34 = arith.constant 0 : index
    %c0_35 = arith.constant 0 : index
    %79 = vector.load %arg12[%c0_34, %c0_35] : memref<128x128xbf16, #tpu.memory_space<vmem>>, vector<128x128xbf16>
    %c0_36 = arith.constant 0 : index
    %c0_37 = arith.constant 0 : index
    %80 = vector.load %arg13[%c0_36, %c0_37] : memref<1x128xf32, #tpu.memory_space<vmem>>, vector<1x128xf32>
    %cst_38 = arith.constant dense<0.000000e+00> : vector<16x128xf32>
    %81 = tpu.matmul %78, %79, %cst_38 {dimension_numbers = #tpu.dot_dimension_numbers<[1], [0], [0], [1], [0, 0, 1, 1], [], []>} : vector<16x128xbf16>, vector<128x128xbf16>, vector<16x128xf32> -> vector<16x128xf32>
    %82 = vector.broadcast %80 : vector<1x128xf32> to vector<16x128xf32>
    %83 = arith.addf %81, %82 : vector<16x128xf32>
    %84 = arith.truncf %83 : vector<16x128xf32> to vector<16x128xbf16>
    %c0_39 = arith.constant 0 : index
    %c0_40 = arith.constant 0 : index
    %85 = vector.load %arg14[%c0_39, %c0_40] : memref<128x128xbf16, #tpu.memory_space<vmem>>, vector<128x128xbf16>
    %c0_41 = arith.constant 0 : index
    %c0_42 = arith.constant 0 : index
    %86 = vector.load %arg15[%c0_41, %c0_42] : memref<1x128xf32, #tpu.memory_space<vmem>>, vector<1x128xf32>
    %cst_43 = arith.constant dense<0.000000e+00> : vector<16x128xf32>
    %87 = tpu.matmul %84, %85, %cst_43 {dimension_numbers = #tpu.dot_dimension_numbers<[1], [0], [0], [1], [0, 0, 1, 1], [], []>} : vector<16x128xbf16>, vector<128x128xbf16>, vector<16x128xf32> -> vector<16x128xf32>
    %88 = vector.broadcast %86 : vector<1x128xf32> to vector<16x128xf32>
    %89 = arith.addf %87, %88 : vector<16x128xf32>
    %cst_44 = arith.constant 0.000000e+00 : f32
    %90 = vector.broadcast %cst_44 : f32 to vector<16x128xf32>
    %91 = arith.maximumf %89, %90 : vector<16x128xf32>
    %92 = vector.broadcast %cst_44 : f32 to vector<16x128xf32>
    %93 = arith.subf %89, %92 : vector<16x128xf32>
    %94 = arith.cmpf one, %93, %93 : vector<16x128xf32>
    %95 = vector.broadcast %cst_44 : f32 to vector<16x128xf32>
    %96 = arith.addf %89, %95 : vector<16x128xf32>
    %97 = math.absf %93 : vector<16x128xf32>
    %cst_45 = arith.constant 0.000000e+00 : f32
    %98 = vector.broadcast %cst_45 : f32 to vector<16x128xf32>
    %99 = arith.subf %98, %97 : vector<16x128xf32>
    %100 = math.exp %99 : vector<16x128xf32>
    %101 = math.log1p %100 : vector<16x128xf32>
    %102 = arith.addf %91, %101 : vector<16x128xf32>
    %103 = arith.select %94, %96, %102 : vector<16x128xi1>, vector<16x128xf32>
    %cst_46 = arith.constant 0.693147182 : f32
    %104 = vector.broadcast %cst_46 : f32 to vector<16x128xf32>
    %105 = arith.subf %103, %104 : vector<16x128xf32>
    %106 = arith.truncf %105 : vector<16x128xf32> to vector<16x128xbf16>
    %c0_47 = arith.constant 0 : index
    %c0_48 = arith.constant 0 : index
    %107 = vector.load %arg16[%c0_47, %c0_48] : memref<128x128xbf16, #tpu.memory_space<vmem>>, vector<128x128xbf16>
    %c0_49 = arith.constant 0 : index
    %c0_50 = arith.constant 0 : index
    %108 = vector.load %arg17[%c0_49, %c0_50] : memref<1x128xf32, #tpu.memory_space<vmem>>, vector<1x128xf32>
    %cst_51 = arith.constant dense<0.000000e+00> : vector<16x128xf32>
    %109 = tpu.matmul %106, %107, %cst_51 {dimension_numbers = #tpu.dot_dimension_numbers<[1], [0], [0], [1], [0, 0, 1, 1], [], []>} : vector<16x128xbf16>, vector<128x128xbf16>, vector<16x128xf32> -> vector<16x128xf32>
    %110 = vector.broadcast %108 : vector<1x128xf32> to vector<16x128xf32>
    %111 = arith.addf %109, %110 : vector<16x128xf32>
    %c0_52 = arith.constant 0 : index
    %c0_53 = arith.constant 0 : index
    %112 = vector.load %arg18[%c0_52, %c0_53] : memref<16x128xf32, #tpu.memory_space<vmem>>, vector<16x128xf32>
    tpu.vector_store %arg18[%c0_52, %c0_53], %111 {strides = array<i32>} : memref<16x128xf32, #tpu.memory_space<vmem>>, vector<16x128xf32>,
    return
  }
  func.func @transform_0(%arg0: i32) -> (i32, i32) {
    %c0_i32 = arith.constant 0 : i32
    %c0_i32_0 = arith.constant 0 : i32
    return %arg0, %c0_i32 : i32, i32
  }
  func.func @transform_1(%arg0: i32) -> (i32, i32) {
    %c0_i32 = arith.constant 0 : i32
    %c0_i32_0 = arith.constant 0 : i32
    %c0_i32_1 = arith.constant 0 : i32
    return %c0_i32, %c0_i32_0 : i32, i32
  }
  func.func @transform_2(%arg0: i32) -> (i32, i32) {
    %c0_i32 = arith.constant 0 : i32
    %c0_i32_0 = arith.constant 0 : i32
    %c0_i32_1 = arith.constant 0 : i32
    return %c0_i32, %c0_i32_0 : i32, i32
  }
  func.func @transform_3(%arg0: i32) -> (i32, i32) {
    %c0_i32 = arith.constant 0 : i32
    %c0_i32_0 = arith.constant 0 : i32
    %c0_i32_1 = arith.constant 0 : i32
    return %c0_i32, %c0_i32_0 : i32, i32
  }
  func.func @transform_4(%arg0: i32) -> (i32, i32) {
    %c0_i32 = arith.constant 0 : i32
    %c0_i32_0 = arith.constant 0 : i32
    %c0_i32_1 = arith.constant 0 : i32
    return %c0_i32, %c0_i32_0 : i32, i32
  }
  func.func @transform_5(%arg0: i32) -> (i32, i32) {
    %c0_i32 = arith.constant 0 : i32
    %c0_i32_0 = arith.constant 0 : i32
    %c0_i32_1 = arith.constant 0 : i32
    return %c0_i32, %c0_i32_0 : i32, i32
  }
  func.func @transform_6(%arg0: i32) -> (i32, i32) {
    %c0_i32 = arith.constant 0 : i32
    %c0_i32_0 = arith.constant 0 : i32
    %c0_i32_1 = arith.constant 0 : i32
    return %c0_i32, %c0_i32_0 : i32, i32
  }
  func.func @transform_7(%arg0: i32) -> (i32, i32) {
    %c0_i32 = arith.constant 0 : i32
    %c0_i32_0 = arith.constant 0 : i32
    %c0_i32_1 = arith.constant 0 : i32
    return %c0_i32, %c0_i32_0 : i32, i32
  }
  func.func @transform_8(%arg0: i32) -> (i32, i32) {
    %c0_i32 = arith.constant 0 : i32
    %c0_i32_0 = arith.constant 0 : i32
    %c0_i32_1 = arith.constant 0 : i32
    return %c0_i32, %c0_i32_0 : i32, i32
  }
  func.func @transform_9(%arg0: i32) -> (i32, i32) {
    %c0_i32 = arith.constant 0 : i32
    %c0_i32_0 = arith.constant 0 : i32
    %c0_i32_1 = arith.constant 0 : i32
    return %c0_i32, %c0_i32_0 : i32, i32
  }
  func.func @transform_10(%arg0: i32) -> (i32, i32) {
    %c0_i32 = arith.constant 0 : i32
    %c0_i32_0 = arith.constant 0 : i32
    %c0_i32_1 = arith.constant 0 : i32
    return %c0_i32, %c0_i32_0 : i32, i32
  }
  func.func @transform_11(%arg0: i32) -> (i32, i32) {
    %c0_i32 = arith.constant 0 : i32
    %c0_i32_0 = arith.constant 0 : i32
    %c0_i32_1 = arith.constant 0 : i32
    return %c0_i32, %c0_i32_0 : i32, i32
  }
  func.func @transform_12(%arg0: i32) -> (i32, i32) {
    %c0_i32 = arith.constant 0 : i32
    %c0_i32_0 = arith.constant 0 : i32
    %c0_i32_1 = arith.constant 0 : i32
    return %c0_i32, %c0_i32_0 : i32, i32
  }
  func.func @transform_13(%arg0: i32) -> (i32, i32) {
    %c0_i32 = arith.constant 0 : i32
    %c0_i32_0 = arith.constant 0 : i32
    %c0_i32_1 = arith.constant 0 : i32
    return %c0_i32, %c0_i32_0 : i32, i32
  }
  func.func @transform_14(%arg0: i32) -> (i32, i32) {
    %c0_i32 = arith.constant 0 : i32
    %c0_i32_0 = arith.constant 0 : i32
    %c0_i32_1 = arith.constant 0 : i32
    return %c0_i32, %c0_i32_0 : i32, i32
  }
  func.func @transform_15(%arg0: i32) -> (i32, i32) {
    %c0_i32 = arith.constant 0 : i32
    %c0_i32_0 = arith.constant 0 : i32
    %c0_i32_1 = arith.constant 0 : i32
    return %c0_i32, %c0_i32_0 : i32, i32
  }
  func.func @transform_16(%arg0: i32) -> (i32, i32) {
    %c0_i32 = arith.constant 0 : i32
    %c0_i32_0 = arith.constant 0 : i32
    %c0_i32_1 = arith.constant 0 : i32
    return %c0_i32, %c0_i32_0 : i32, i32
  }
  func.func @transform_17(%arg0: i32) -> (i32, i32) {
    %c0_i32 = arith.constant 0 : i32
    %c0_i32_0 = arith.constant 0 : i32
    return %arg0, %c0_i32 : i32, i32
  }
}

</mosaic_0001>

<llo_original>
// kernel: tpu_custom_call.1
$region0: #{tpu_custom_call.1}
  #allocation0 [shape = 'u32[]', space=smem, size = 0x4, offset = 0x4, fixed_abs, tag = 'smem constant byte address 0x4 - core index']
  #allocation1 [shape = 'u32[144,128]{1,0:T(1,128)}', space=vmem, size = 0x12000, scoped, tag = 'internal scratch']
  %s0 = inlined_call_operand.hbm [shape: bf16[16,128], index: 0, kind: input, shape index: {}]
  %s1 = inlined_call_operand.hbm [shape: bf16[128,128], index: 1, kind: input, shape index: {}]
  %s2 = inlined_call_operand.vmem [shape: f32[1,128], index: 2, kind: input, shape index: {}]
  %s3 = inlined_call_operand.hbm [shape: bf16[128,128], index: 3, kind: input, shape index: {}]
  %s4 = inlined_call_operand.vmem [shape: f32[1,128], index: 4, kind: input, shape index: {}]
  %s5 = inlined_call_operand.hbm [shape: bf16[128,128], index: 5, kind: input, shape index: {}]
  %s6 = inlined_call_operand.vmem [shape: f32[1,128], index: 6, kind: input, shape index: {}]
  %s7 = inlined_call_operand.hbm [shape: bf16[128,128], index: 7, kind: input, shape index: {}]
  %s8 = inlined_call_operand.vmem [shape: f32[1,128], index: 8, kind: input, shape index: {}]
  %s9 = inlined_call_operand.hbm [shape: bf16[128,128], index: 9, kind: input, shape index: {}]
  %s10 = inlined_call_operand.vmem [shape: f32[1,128], index: 10, kind: input, shape index: {}]
  %s11 = inlined_call_operand.hbm [shape: bf16[128,128], index: 11, kind: input, shape index: {}]
  %s12 = inlined_call_operand.vmem [shape: f32[1,128], index: 12, kind: input, shape index: {}]
  %s13 = inlined_call_operand.hbm [shape: bf16[128,128], index: 13, kind: input, shape index: {}]
  %s14 = inlined_call_operand.vmem [shape: f32[1,128], index: 14, kind: input, shape index: {}]
  %s15 = inlined_call_operand.hbm [shape: bf16[128,128], index: 15, kind: input, shape index: {}]
  %s16 = inlined_call_operand.vmem [shape: f32[1,128], index: 16, kind: input, shape index: {}]
  %s17 = inlined_call_operand.hbm [shape: f32[16,128], index: 17, kind: output, shape index: {}]
  %s18 = sld [smem:[#allocation0]]
  $region114: #{tpu_custom_call.1} parent=0
    _
  %s20 = ssub.s32 1, %s18
  %s21 = scalar_select 0, %s20, %s18
  $region1: #{tpu_custom_call.1} parent=0
    #allocation2 [shape = 'u8[4096]{0}', space=vmem, size = 0x1000, scoped, tag = 'input window, operand 0, single buffered']
    #allocation3 [shape = 's32[1]{0}', space=sflag, size = 0x4, scoped, tag = 'scoped memory for tpu_custom_call.1']
    #allocation4 [shape = 's32[1]{0}', space=sflag, size = 0x4, scoped, tag = 'scoped memory for tpu_custom_call.1']
    #allocation5 [shape = 'u8[32768]{0}', space=vmem, size = 0x8000, scoped, tag = 'input window, operand 1, single buffered']
    #allocation6 [shape = 's32[1]{0}', space=sflag, size = 0x4, scoped, tag = 'scoped memory for tpu_custom_call.1']
    #allocation7 [shape = 'u8[32768]{0}', space=vmem, size = 0x8000, scoped, tag = 'input window, operand 3, single buffered']
    #allocation8 [shape = 'u8[32768]{0}', space=vmem, size = 0x8000, scoped, tag = 'input window, operand 5, single buffered']
    #allocation9 [shape = 's32[1]{0}', space=sflag, size = 0x4, scoped, tag = 'scoped memory for tpu_custom_call.1']
    #allocation10 [shape = 'u8[32768]{0}', space=vmem, size = 0x8000, scoped, tag = 'input window, operand 7, single buffered']
    #allocation11 [shape = 'u8[32768]{0}', space=vmem, size = 0x8000, scoped, tag = 'input window, operand 9, single buffered']
    #allocation12 [shape = 's32[1]{0}', space=sflag, size = 0x4, scoped, tag = 'scoped memory for tpu_custom_call.1']
    #allocation13 [shape = 'u8[32768]{0}', space=vmem, size = 0x8000, scoped, tag = 'input window, operand 11, single buffered']
    #allocation14 [shape = 'u8[32768]{0}', space=vmem, size = 0x8000, scoped, tag = 'input window, operand 13, single buffered']
    #allocation15 [shape = 's32[1]{0}', space=sflag, size = 0x4, scoped, tag = 'scoped memory for tpu_custom_call.1']
    #allocation16 [shape = 'u8[32768]{0}', space=vmem, size = 0x8000, scoped, tag = 'input window, operand 15, single buffered']
    #allocation17 [shape = 'u8[8192]{0}', space=vmem, size = 0x2000, scoped, tag = 'output window, operand 0, single buffered']
    %22 = vsyncpa [#allocation3], 0
    %23 = vsyncpa [#allocation6], 0
    %24 = vsyncpa [#allocation9], 0
    %25 = vsyncpa [#allocation12], 0
    %26 = vsyncpa [#allocation15], 0
    %27 = vsyncpa [#allocation4], 0
    // Predicated region
    $region2: #{tpu_custom_call.1} parent=1 // pred_check
      _
    $region3: #{tpu_custom_call.1} parent=1 // pred_check_branch
      %29 = sbr.rel (0) target = $region5
    $region4: #{tpu_custom_call.1} parent=1 // pred_region
      %s31 = ssub.s32 128, 128
      %32 = vsyncadd [#allocation3], %s31
      %s33 = sshll.u32 [#allocation2], 4
      %s34 = int_to_ptr.vmem [resolvable:$true] %s33
      %39 = dma.hbm_to_vmem [thread:$0]  %s0, 128, %s34, [#allocation3], 64, 64, 4
    $region5: #{tpu_custom_call.1} parent=1 // pred_fallthru
      _
    // Predicated region
    $region6: #{tpu_custom_call.1} parent=1 // pred_check
      _
    $region7: #{tpu_custom_call.1} parent=1 // pred_check_branch
      %41 = sbr.rel (0) target = $region9
    $region8: #{tpu_custom_call.1} parent=1 // pred_region
      %s43 = ssub.s32 1024, 1024
      %44 = vsyncadd [#allocation6], %s43
      %s45 = sshll.u32 [#allocation5], 4
      %s46 = int_to_ptr.vmem [resolvable:$true] %s45
      %51 = dma.hbm_to_vmem [thread:$0]  %s1, 1024, %s46, [#allocation6], 64, 64, 4
    $region9: #{tpu_custom_call.1} parent=1 // pred_fallthru
      _
    // Predicated region
    $region10: #{tpu_custom_call.1} parent=1 // pred_check
      _
    $region11: #{tpu_custom_call.1} parent=1 // pred_check_branch
      %53 = sbr.rel (0) target = $region13
    $region12: #{tpu_custom_call.1} parent=1 // pred_region
      _
    $region13: #{tpu_custom_call.1} parent=1 // pred_fallthru
      _
    // Predicated region
    $region14: #{tpu_custom_call.1} parent=1 // pred_check
      _
    $region15: #{tpu_custom_call.1} parent=1 // pred_check_branch
      %55 = sbr.rel (0) target = $region17
    $region16: #{tpu_custom_call.1} parent=1 // pred_region
      %s57 = ssub.s32 1024, 1024
      %58 = vsyncadd [#allocation6], %s57
      %s59 = sshll.u32 [#allocation7], 4
      %s60 = int_to_ptr.vmem [resolvable:$true] %s59
      %65 = dma.hbm_to_vmem [thread:$0]  %s3, 1024, %s60, [#allocation6], 64, 64, 4
    $region17: #{tpu_custom_call.1} parent=1 // pred_fallthru
      _
    // Predicated region
    $region18: #{tpu_custom_call.1} parent=1 // pred_check
      _
    $region19: #{tpu_custom_call.1} parent=1 // pred_check_branch
      %67 = sbr.rel (0) target = $region21
    $region20: #{tpu_custom_call.1} parent=1 // pred_region
      _
    $region21: #{tpu_custom_call.1} parent=1 // pred_fallthru
      _
    // Predicated region
    $region22: #{tpu_custom_call.1} parent=1 // pred_check
      _
    $region23: #{tpu_custom_call.1} parent=1 // pred_check_branch
      %69 = sbr.rel (0) target = $region25
    $region24: #{tpu_custom_call.1} parent=1 // pred_region
      %s71 = ssub.s32 1024, 1024
      %72 = vsyncadd [#allocation9], %s71
      %s73 = sshll.u32 [#allocation8], 4
      %s74 = int_to_ptr.vmem [resolvable:$true] %s73
      %79 = dma.hbm_to_vmem [thread:$0]  %s5, 1024, %s74, [#allocation9], 64, 64, 4
    $region25: #{tpu_custom_call.1} parent=1 // pred_fallthru
      _
    // Predicated region
    $region26: #{tpu_custom_call.1} parent=1 // pred_check
      _
    $region27: #{tpu_custom_call.1} parent=1 // pred_check_branch
      %81 = sbr.rel (0) target = $region29
    $region28: #{tpu_custom_call.1} parent=1 // pred_region
      _
    $region29: #{tpu_custom_call.1} parent=1 // pred_fallthru
      _
    // Predicated region
    $region30: #{tpu_custom_call.1} parent=1 // pred_check
      _
    $region31: #{tpu_custom_call.1} parent=1 // pred_check_branch
      %83 = sbr.rel (0) target = $region33
    $region32: #{tpu_custom_call.1} parent=1 // pred_region
      %s85 = ssub.s32 1024, 1024
      %86 = vsyncadd [#allocation9], %s85
      %s87 = sshll.u32 [#allocation10], 4
      %s88 = int_to_ptr.vmem [resolvable:$true] %s87
      %93 = dma.hbm_to_vmem [thread:$0]  %s7, 1024, %s88, [#allocation9], 64, 64, 4
    $region33: #{tpu_custom_call.1} parent=1 // pred_fallthru
      _
    // Predicated region
    $region34: #{tpu_custom_call.1} parent=1 // pred_check
      _
    $region35: #{tpu_custom_call.1} parent=1 // pred_check_branch
      %95 = sbr.rel (0) target = $region37
    $region36: #{tpu_custom_call.1} parent=1 // pred_region
      _
    $region37: #{tpu_custom_call.1} parent=1 // pred_fallthru
      _
    // Predicated region
    $region38: #{tpu_custom_call.1} parent=1 // pred_check
      _
    $region39: #{tpu_custom_call.1} parent=1 // pred_check_branch
      %97 = sbr.rel (0) target = $region41
    $region40: #{tpu_custom_call.1} parent=1 // pred_region
      %s99 = ssub.s32 1024, 1024
      %100 = vsyncadd [#allocation12], %s99
      %s101 = sshll.u32 [#allocation11], 4
      %s102 = int_to_ptr.vmem [resolvable:$true] %s101
      %107 = dma.hbm_to_vmem [thread:$0]  %s9, 1024, %s102, [#allocation12], 64, 64, 4
    $region41: #{tpu_custom_call.1} parent=1 // pred_fallthru
      _
    // Predicated region
    $region42: #{tpu_custom_call.1} parent=1 // pred_check
      _
    $region43: #{tpu_custom_call.1} parent=1 // pred_check_branch
      %109 = sbr.rel (0) target = $region45
    $region44: #{tpu_custom_call.1} parent=1 // pred_region
      _
    $region45: #{tpu_custom_call.1} parent=1 // pred_fallthru
      _
    // Predicated region
    $region46: #{tpu_custom_call.1} parent=1 // pred_check
      _
    $region47: #{tpu_custom_call.1} parent=1 // pred_check_branch
      %111 = sbr.rel (0) target = $region49
    $region48: #{tpu_custom_call.1} parent=1 // pred_region
      %s113 = ssub.s32 1024, 1024
      %114 = vsyncadd [#allocation12], %s113
      %s115 = sshll.u32 [#allocation13], 4
      %s116 = int_to_ptr.vmem [resolvable:$true] %s115
      %121 = dma.hbm_to_vmem [thread:$0]  %s11, 1024, %s116, [#allocation12], 64, 64, 4
    $region49: #{tpu_custom_call.1} parent=1 // pred_fallthru
      _
    // Predicated region
    $region50: #{tpu_custom_call.1} parent=1 // pred_check
      _
    $region51: #{tpu_custom_call.1} parent=1 // pred_check_branch
      %123 = sbr.rel (0) target = $region53
    $region52: #{tpu_custom_call.1} parent=1 // pred_region
      _
    $region53: #{tpu_custom_call.1} parent=1 // pred_fallthru
      _
    // Predicated region
    $region54: #{tpu_custom_call.1} parent=1 // pred_check
      _
    $region55: #{tpu_custom_call.1} parent=1 // pred_check_branch
      %125 = sbr.rel (0) target = $region57
    $region56: #{tpu_custom_call.1} parent=1 // pred_region
      %s127 = ssub.s32 1024, 1024
      %128 = vsyncadd [#allocation15], %s127
      %s129 = sshll.u32 [#allocation14], 4
      %s130 = int_to_ptr.vmem [resolvable:$true] %s129
      %135 = dma.hbm_to_vmem [thread:$0]  %s13, 1024, %s130, [#allocation15], 64, 64, 4
    $region57: #{tpu_custom_call.1} parent=1 // pred_fallthru
      _
    // Predicated region
    $region58: #{tpu_custom_call.1} parent=1 // pred_check
      _
    $region59: #{tpu_custom_call.1} parent=1 // pred_check_branch
      %137 = sbr.rel (0) target = $region61
    $region60: #{tpu_custom_call.1} parent=1 // pred_region
      _
    $region61: #{tpu_custom_call.1} parent=1 // pred_fallthru
      _
    // Predicated region
    $region62: #{tpu_custom_call.1} parent=1 // pred_check
      _
    $region63: #{tpu_custom_call.1} parent=1 // pred_check_branch
      %139 = sbr.rel (0) target = $region65
    $region64: #{tpu_custom_call.1} parent=1 // pred_region
      %s141 = ssub.s32 1024, 1024
      %142 = vsyncadd [#allocation15], %s141
      %s143 = sshll.u32 [#allocation16], 4
      %s144 = int_to_ptr.vmem [resolvable:$true] %s143
      %149 = dma.hbm_to_vmem [thread:$0]  %s15, 1024, %s144, [#allocation15], 64, 64, 4
    $region65: #{tpu_custom_call.1} parent=1 // pred_fallthru
      _
    // Predicated region
    $region66: #{tpu_custom_call.1} parent=1 // pred_check
      _
    $region67: #{tpu_custom_call.1} parent=1 // pred_check_branch
      %151 = sbr.rel (0) target = $region69
    $region68: #{tpu_custom_call.1} parent=1 // pred_region
      _
    $region69: #{tpu_custom_call.1} parent=1 // pred_fallthru
      _
    // Predicated region
    $region70: #{tpu_custom_call.1} parent=1 // pred_check
      _
    $region71: #{tpu_custom_call.1} parent=1 // pred_check_branch
      %153 = sbr.rel (0) target = $region73
    $region72: #{tpu_custom_call.1} parent=1 // pred_region
      %154 = dma.done [#allocation3], 128
    $region73: #{tpu_custom_call.1} parent=1 // pred_fallthru
      _
    // Predicated region
    $region74: #{tpu_custom_call.1} parent=1 // pred_check
      _
    $region75: #{tpu_custom_call.1} parent=1 // pred_check_branch
      %156 = sbr.rel (0) target = $region77
    $region76: #{tpu_custom_call.1} parent=1 // pred_region
      %157 = dma.done [#allocation6], 1024
    $region77: #{tpu_custom_call.1} parent=1 // pred_fallthru
      _
    // Predicated region
    $region78: #{tpu_custom_call.1} parent=1 // pred_check
      _
    $region79: #{tpu_custom_call.1} parent=1 // pred_check_branch
      %159 = sbr.rel (0) target = $region81
    $region80: #{tpu_custom_call.1} parent=1 // pred_region
      %160 = dma.done [#allocation6], 1024
    $region81: #{tpu_custom_call.1} parent=1 // pred_fallthru
      _
    // Predicated region
    $region82: #{tpu_custom_call.1} parent=1 // pred_check
      _
    $region83: #{tpu_custom_call.1} parent=1 // pred_check_branch
      %162 = sbr.rel (0) target = $region85
    $region84: #{tpu_custom_call.1} parent=1 // pred_region
      %163 = dma.done [#allocation9], 1024
    $region85: #{tpu_custom_call.1} parent=1 // pred_fallthru
      _
    // Predicated region
    $region86: #{tpu_custom_call.1} parent=1 // pred_check
      _
    $region87: #{tpu_custom_call.1} parent=1 // pred_check_branch
      %165 = sbr.rel (0) target = $region89
    $region88: #{tpu_custom_call.1} parent=1 // pred_region
      %166 = dma.done [#allocation9], 1024
    $region89: #{tpu_custom_call.1} parent=1 // pred_fallthru
      _
    // Predicated region
    $region90: #{tpu_custom_call.1} parent=1 // pred_check
      _
    $region91: #{tpu_custom_call.1} parent=1 // pred_check_branch
      %168 = sbr.rel (0) target = $region93
    $region92: #{tpu_custom_call.1} parent=1 // pred_region
      %169 = dma.done [#allocation12], 1024
    $region93: #{tpu_custom_call.1} parent=1 // pred_fallthru
      _
    // Predicated region
    $region94: #{tpu_custom_call.1} parent=1 // pred_check
      _
    $region95: #{tpu_custom_call.1} parent=1 // pred_check_branch
      %171 = sbr.rel (0) target = $region97
    $region96: #{tpu_custom_call.1} parent=1 // pred_region
      %172 = dma.done [#allocation12], 1024
    $region97: #{tpu_custom_call.1} parent=1 // pred_fallthru
      _
    // Predicated region
    $region98: #{tpu_custom_call.1} parent=1 // pred_check
      _
    $region99: #{tpu_custom_call.1} parent=1 // pred_check_branch
      %174 = sbr.rel (0) target = $region101
    $region100: #{tpu_custom_call.1} parent=1 // pred_region
      %175 = dma.done [#allocation15], 1024
    $region101: #{tpu_custom_call.1} parent=1 // pred_fallthru
      _
    // Predicated region
    $region102: #{tpu_custom_call.1} parent=1 // pred_check
      _
    $region103: #{tpu_custom_call.1} parent=1 // pred_check_branch
      %177 = sbr.rel (0) target = $region105
    $region104: #{tpu_custom_call.1} parent=1 // pred_region
      %178 = dma.done [#allocation15], 1024
    $region105: #{tpu_custom_call.1} parent=1 // pred_fallthru
      _
    %v180 = vld [vmem:[#allocation2] sm:$0xf]
    %v181 = vld [vmem:[#allocation2 + $0x4] sm:$0xf]
    %v182 = vld [vmem:[#allocation5] sm:$0xf]
    %v183 = vld [vmem:[#allocation5 + $0x4] sm:$0xf]
    %v184 = vld [vmem:[#allocation5 + $0x8] sm:$0xf]
    %v185 = vld [vmem:[#allocation5 + $0xc] sm:$0xf]
    %v186 = vld [vmem:[#allocation5 + $0x10] sm:$0xf]
    %v187 = vld [vmem:[#allocation5 + $0x14] sm:$0xf]
    %v188 = vld [vmem:[#allocation5 + $0x18] sm:$0xf]
    %v189 = vld [vmem:[#allocation5 + $0x1c] sm:$0xf]
    %v190 = vld [vmem:[#allocation5 + $0x20] sm:$0xf]
    %v191 = vld [vmem:[#allocation5 + $0x24] sm:$0xf]
    %v192 = vld [vmem:[#allocation5 + $0x28] sm:$0xf]
    %v193 = vld [vmem:[#allocation5 + $0x2c] sm:$0xf]
    %v194 = vld [vmem:[#allocation5 + $0x30] sm:$0xf]
    %v195 = vld [vmem:[#allocation5 + $0x34] sm:$0xf]
    %v196 = vld [vmem:[#allocation5 + $0x38] sm:$0xf]
    %v197 = vld [vmem:[#allocation5 + $0x3c] sm:$0xf]
    %v198 = vld [vmem:[%s2] sm:$0x1]
    %v200 = vlaneseq
    %v201 = vshrl.u32 %v200, 7
    %v202 = vsub.s32 0, %v201
    %v203 = vrot.slane %v198, %v202
    %v207 = vunpack.c.l.b16 %v180
    %v208 = vunpack.c.l.b16 %v181
    %v209 = vpack.c.b16 %v208, %v207
    %v227 = vunpack.c.l.b16 %v182
    %v228 = vunpack.c.l.b16 %v183
    %v229 = vunpack.c.l.b16 %v184
    %v230 = vunpack.c.l.b16 %v185
    %v231 = vunpack.c.l.b16 %v186
    %v232 = vunpack.c.l.b16 %v187
    %v233 = vunpack.c.l.b16 %v188
    %v234 = vunpack.c.l.b16 %v189
    %v235 = vunpack.c.l.b16 %v190
    %v236 = vunpack.c.l.b16 %v191
    %v237 = vunpack.c.l.b16 %v192
    %v238 = vunpack.c.l.b16 %v193
    %v239 = vunpack.c.l.b16 %v194
    %v240 = vunpack.c.l.b16 %v195
    %v241 = vunpack.c.l.b16 %v196
    %v242 = vunpack.c.l.b16 %v197
    %v243 = vpack.c.b16 %v228, %v227
    %v244 = vpack.c.b16 %v230, %v229
    %v245 = vpack.c.b16 %v232, %v231
    %v246 = vpack.c.b16 %v234, %v233
    %v247 = vpack.c.b16 %v236, %v235
    %v248 = vpack.c.b16 %v238, %v237
    %v249 = vpack.c.b16 %v240, %v239
    %v250 = vpack.c.b16 %v242, %v241
    %259 = vmatprep.subr.bf16.mxu0 0
    %260 = vmatpush1.bf16.msra.mxu0 %v250
    %261 = vmatprep.subr.bf16.mxu0 0
    %262 = vmatpush1.bf16.msra.mxu0 %v249
    %263 = vmatprep.subr.bf16.mxu0 0
    %264 = vmatpush1.bf16.msra.mxu0 %v248
    %265 = vmatprep.subr.bf16.mxu0 0
    %266 = vmatpush1.bf16.msra.mxu0 %v247
    %267 = vmatprep.subr.bf16.mxu0 0
    %268 = vmatpush1.bf16.msra.mxu0 %v246
    %269 = vmatprep.subr.bf16.mxu0 0
    %270 = vmatpush1.bf16.msra.mxu0 %v245
    %271 = vmatprep.subr.bf16.mxu0 0
    %272 = vmatpush1.bf16.msra.mxu0 %v244
    %273 = vmatprep.subr.bf16.mxu0 0
    %274 = vmatpush1.bf16.msra.mxu0 %v243
    %275 = vmatprep.subr.bf16.mxu0 0
    %276 = vmatpush2.bf16.msra.mxu0 0
    %277 = vmatprep.subr.bf16.mxu0 0
    %278 = vmatpush2.bf16.msra.mxu0 0
    %279 = vmatprep.subr.bf16.mxu0 0
    %280 = vmatpush2.bf16.msra.mxu0 0
    %281 = vmatprep.subr.bf16.mxu0 0
    %282 = vmatpush2.bf16.msra.mxu0 0
    %283 = vmatprep.subr.bf16.mxu0 0
    %284 = vmatpush2.bf16.msra.mxu0 0
    %285 = vmatprep.subr.bf16.mxu0 0
    %286 = vmatpush2.bf16.msra.mxu0 0
    %287 = vmatprep.subr.bf16.mxu0 0
    %288 = vmatpush2.bf16.msra.mxu0 0
    %289 = vmatprep.subr.bf16.mxu0 0
    %290 = vmatpush2.bf16.msra.mxu0 0
    %291 = vmatprep.mubr.bf16.mxu0 0
    %292 = vmatmul.mubr.bf16.gmra.mxu0 %v209
    %v293 = vpop.f32.mrf.mxu0
    %v294 = vadd.f32 %v203, %v293
    %v295 = vpop.f32.mrf.mxu0
    %v296 = vpop.f32.mrf.mxu0
    %v297 = vadd.f32 %v203, %v296
    %v298 = vpop.f32.mrf.mxu0
    %299 = vdwg.mxu0
    %v300 = vmax.f32 %v294, 0.0
    %v301 = vmax.f32 %v297, 0.0
    %vm302 = vcmp.ne.f32.partialorder %v294, %v294
    %vm303 = vcmp.ne.f32.partialorder %v297, %v297
    %v304 = vadd.f32 %v294, 0.0
    %v305 = vadd.f32 %v297, 0.0
    %v306 = vand.u32 2147483647, %v294
    %v307 = vand.u32 2147483647, %v297
    %v308 = vsub.f32 0.0, %v306
    %v309 = vsub.f32 0.0, %v307
    %v310 = vmul.f32 %v308, 1.442695
    %v311 = vpow.pop %v310
    %v312 = vmul.f32 %v309, 1.442695
    %v313 = vpow.pop %v312
    %v314 = vadd.f32 %v311, 1.0
    %v315 = vlog2.pop %v314
    %v316 = vmul.f32 %v315, 0.6931472
    %v317 = vmul.f32 -0.5, %v311
    %v318 = vadd.f32 %v317, 1.0
    %v319 = vmul.f32 %v318, %v311
    %v320 = vand.u32 2147483647, %v311
    %vm321 = vcmp.lt.f32.partialorder %v320, 0.0004427343
    %v322 = vsel %vm321, %v319, %v316
    %v323 = vadd.f32 %v313, 1.0
    %v324 = vlog2.pop %v323
    %v325 = vmul.f32 %v324, 0.6931472
    %v326 = vmul.f32 -0.5, %v313
    %v327 = vadd.f32 %v326, 1.0
    %v328 = vmul.f32 %v327, %v313
    %v329 = vand.u32 2147483647, %v313
    %vm330 = vcmp.lt.f32.partialorder %v329, 0.0004427343
    %v331 = vsel %vm330, %v328, %v325
    %v332 = vadd.f32 %v300, %v322
    %v333 = vadd.f32 %v301, %v331
    %v334 = vsel %vm302, %v304, %v332
    %v335 = vsel %vm303, %v305, %v333
    %v336 = vsub.f32 %v334, 0.6931472
    %v337 = vsub.f32 %v335, 0.6931472
    %v338 = vpack.c.bf16 %v337, %v336
    %v339 = vld [vmem:[#allocation7] sm:$0xf]
    %v340 = vld [vmem:[#allocation7 + $0x4] sm:$0xf]
    %v341 = vld [vmem:[#allocation7 + $0x8] sm:$0xf]
    %v342 = vld [vmem:[#allocation7 + $0xc] sm:$0xf]
    %v343 = vld [vmem:[#allocation7 + $0x10] sm:$0xf]
    %v344 = vld [vmem:[#allocation7 + $0x14] sm:$0xf]
    %v345 = vld [vmem:[#allocation7 + $0x18] sm:$0xf]
    %v346 = vld [vmem:[#allocation7 + $0x1c] sm:$0xf]
    %v347 = vld [vmem:[#allocation7 + $0x20] sm:$0xf]
    %v348 = vld [vmem:[#allocation7 + $0x24] sm:$0xf]
    %v349 = vld [vmem:[#allocation7 + $0x28] sm:$0xf]
    %v350 = vld [vmem:[#allocation7 + $0x2c] sm:$0xf]
    %v351 = vld [vmem:[#allocation7 + $0x30] sm:$0xf]
    %v352 = vld [vmem:[#allocation7 + $0x34] sm:$0xf]
    %v353 = vld [vmem:[#allocation7 + $0x38] sm:$0xf]
    %v354 = vld [vmem:[#allocation7 + $0x3c] sm:$0xf]
    %v355 = vld [vmem:[%s4] sm:$0x1]
    %v357 = vlaneseq
    %v358 = vshrl.u32 %v357, 7
    %v359 = vsub.s32 0, %v358
    %v360 = vrot.slane %v355, %v359
    %v378 = vunpack.c.l.b16 %v339
    %v379 = vunpack.c.l.b16 %v340
    %v380 = vunpack.c.l.b16 %v341
    %v381 = vunpack.c.l.b16 %v342
    %v382 = vunpack.c.l.b16 %v343
    %v383 = vunpack.c.l.b16 %v344
    %v384 = vunpack.c.l.b16 %v345
    %v385 = vunpack.c.l.b16 %v346
    %v386 = vunpack.c.l.b16 %v347
    %v387 = vunpack.c.l.b16 %v348
    %v388 = vunpack.c.l.b16 %v349
    %v389 = vunpack.c.l.b16 %v350
    %v390 = vunpack.c.l.b16 %v351
    %v391 = vunpack.c.l.b16 %v352
    %v392 = vunpack.c.l.b16 %v353
    %v393 = vunpack.c.l.b16 %v354
    %v394 = vpack.c.b16 %v379, %v378
    %v395 = vpack.c.b16 %v381, %v380
    %v396 = vpack.c.b16 %v383, %v382
    %v397 = vpack.c.b16 %v385, %v384
    %v398 = vpack.c.b16 %v387, %v386
    %v399 = vpack.c.b16 %v389, %v388
    %v400 = vpack.c.b16 %v391, %v390
    %v401 = vpack.c.b16 %v393, %v392
    %410 = vmatprep.subr.bf16.mxu0 0
    %411 = vmatpush1.bf16.msra.mxu0 %v401
    %412 = vmatprep.subr.bf16.mxu0 0
    %413 = vmatpush1.bf16.msra.mxu0 %v400
    %414 = vmatprep.subr.bf16.mxu0 0
    %415 = vmatpush1.bf16.msra.mxu0 %v399
    %416 = vmatprep.subr.bf16.mxu0 0
    %417 = vmatpush1.bf16.msra.mxu0 %v398
    %418 = vmatprep.subr.bf16.mxu0 0
    %419 = vmatpush1.bf16.msra.mxu0 %v397
    %420 = vmatprep.subr.bf16.mxu0 0
    %421 = vmatpush1.bf16.msra.mxu0 %v396
    %422 = vmatprep.subr.bf16.mxu0 0
    %423 = vmatpush1.bf16.msra.mxu0 %v395
    %424 = vmatprep.subr.bf16.mxu0 0
    %425 = vmatpush1.bf16.msra.mxu0 %v394
    %426 = vmatprep.subr.bf16.mxu0 0
    %427 = vmatpush2.bf16.msra.mxu0 0
    %428 = vmatprep.subr.bf16.mxu0 0
    %429 = vmatpush2.bf16.msra.mxu0 0
    %430 = vmatprep.subr.bf16.mxu0 0
    %431 = vmatpush2.bf16.msra.mxu0 0
    %432 = vmatprep.subr.bf16.mxu0 0
    %433 = vmatpush2.bf16.msra.mxu0 0
    %434 = vmatprep.subr.bf16.mxu0 0
    %435 = vmatpush2.bf16.msra.mxu0 0
    %436 = vmatprep.subr.bf16.mxu0 0
    %437 = vmatpush2.bf16.msra.mxu0 0
    %438 = vmatprep.subr.bf16.mxu0 0
    %439 = vmatpush2.bf16.msra.mxu0 0
    %440 = vmatprep.subr.bf16.mxu0 0
    %441 = vmatpush2.bf16.msra.mxu0 0
    %442 = vmatprep.mubr.bf16.mxu0 0
    %443 = vmatmul.mubr.bf16.gmra.mxu0 %v338
    %v444 = vpop.f32.mrf.mxu0
    %v445 = vadd.f32 %v360, %v444
    %v446 = vpop.f32.mrf.mxu0
    %v447 = vpop.f32.mrf.mxu0
    %v448 = vadd.f32 %v360, %v447
    %v449 = vpop.f32.mrf.mxu0
    %450 = vdwg.mxu0
    %v451 = vpack.c.bf16 %v448, %v445
    %v452 = vld [vmem:[#allocation8] sm:$0xf]
    %v453 = vld [vmem:[#allocation8 + $0x4] sm:$0xf]
    %v454 = vld [vmem:[#allocation8 + $0x8] sm:$0xf]
    %v455 = vld [vmem:[#allocation8 + $0xc] sm:$0xf]
    %v456 = vld [vmem:[#allocation8 + $0x10] sm:$0xf]
    %v457 = vld [vmem:[#allocation8 + $0x14] sm:$0xf]
    %v458 = vld [vmem:[#allocation8 + $0x18] sm:$0xf]
    %v459 = vld [vmem:[#allocation8 + $0x1c] sm:$0xf]
    %v460 = vld [vmem:[#allocation8 + $0x20] sm:$0xf]
    %v461 = vld [vmem:[#allocation8 + $0x24] sm:$0xf]
    %v462 = vld [vmem:[#allocation8 + $0x28] sm:$0xf]
    %v463 = vld [vmem:[#allocation8 + $0x2c] sm:$0xf]
    %v464 = vld [vmem:[#allocation8 + $0x30] sm:$0xf]
    %v465 = vld [vmem:[#allocation8 + $0x34] sm:$0xf]
    %v466 = vld [vmem:[#allocation8 + $0x38] sm:$0xf]
    %v467 = vld [vmem:[#allocation8 + $0x3c] sm:$0xf]
    %v468 = vld [vmem:[%s6] sm:$0x1]
    %v470 = vlaneseq
    %v471 = vshrl.u32 %v470, 7
    %v472 = vsub.s32 0, %v471
    %v473 = vrot.slane %v468, %v472
    %v491 = vunpack.c.l.b16 %v452
    %v492 = vunpack.c.l.b16 %v453
    %v493 = vunpack.c.l.b16 %v454
    %v494 = vunpack.c.l.b16 %v455
    %v495 = vunpack.c.l.b16 %v456
    %v496 = vunpack.c.l.b16 %v457
    %v497 = vunpack.c.l.b16 %v458
    %v498 = vunpack.c.l.b16 %v459
    %v499 = vunpack.c.l.b16 %v460
    %v500 = vunpack.c.l.b16 %v461
    %v501 = vunpack.c.l.b16 %v462
    %v502 = vunpack.c.l.b16 %v463
    %v503 = vunpack.c.l.b16 %v464
    %v504 = vunpack.c.l.b16 %v465
    %v505 = vunpack.c.l.b16 %v466
    %v506 = vunpack.c.l.b16 %v467
    %v507 = vpack.c.b16 %v492, %v491
    %v508 = vpack.c.b16 %v494, %v493
    %v509 = vpack.c.b16 %v496, %v495
    %v510 = vpack.c.b16 %v498, %v497
    %v511 = vpack.c.b16 %v500, %v499
    %v512 = vpack.c.b16 %v502, %v501
    %v513 = vpack.c.b16 %v504, %v503
    %v514 = vpack.c.b16 %v506, %v505
    %523 = vmatprep.subr.bf16.mxu0 0
    %524 = vmatpush1.bf16.msra.mxu0 %v514
    %525 = vmatprep.subr.bf16.mxu0 0
    %526 = vmatpush1.bf16.msra.mxu0 %v513
    %527 = vmatprep.subr.bf16.mxu0 0
    %528 = vmatpush1.bf16.msra.mxu0 %v512
    %529 = vmatprep.subr.bf16.mxu0 0
    %530 = vmatpush1.bf16.msra.mxu0 %v511
    %531 = vmatprep.subr.bf16.mxu0 0
    %532 = vmatpush1.bf16.msra.mxu0 %v510
    %533 = vmatprep.subr.bf16.mxu0 0
    %534 = vmatpush1.bf16.msra.mxu0 %v509
    %535 = vmatprep.subr.bf16.mxu0 0
    %536 = vmatpush1.bf16.msra.mxu0 %v508
    %537 = vmatprep.subr.bf16.mxu0 0
    %538 = vmatpush1.bf16.msra.mxu0 %v507
    %539 = vmatprep.subr.bf16.mxu0 0
    %540 = vmatpush2.bf16.msra.mxu0 0
    %541 = vmatprep.subr.bf16.mxu0 0
    %542 = vmatpush2.bf16.msra.mxu0 0
    %543 = vmatprep.subr.bf16.mxu0 0
    %544 = vmatpush2.bf16.msra.mxu0 0
    %545 = vmatprep.subr.bf16.mxu0 0
    %546 = vmatpush2.bf16.msra.mxu0 0
    %547 = vmatprep.subr.bf16.mxu0 0
    %548 = vmatpush2.bf16.msra.mxu0 0
    %549 = vmatprep.subr.bf16.mxu0 0
    %550 = vmatpush2.bf16.msra.mxu0 0
    %551 = vmatprep.subr.bf16.mxu0 0
    %552 = vmatpush2.bf16.msra.mxu0 0
    %553 = vmatprep.subr.bf16.mxu0 0
    %554 = vmatpush2.bf16.msra.mxu0 0
    %555 = vmatprep.mubr.bf16.mxu0 0
    %556 = vmatmul.mubr.bf16.gmra.mxu0 %v451
    %v557 = vpop.f32.mrf.mxu0
    %v558 = vadd.f32 %v473, %v557
    %v559 = vpop.f32.mrf.mxu0
    %v560 = vpop.f32.mrf.mxu0
    %v561 = vadd.f32 %v473, %v560
    %v562 = vpop.f32.mrf.mxu0
    %563 = vdwg.mxu0
    %v564 = vmax.f32 %v558, 0.0
    %v565 = vmax.f32 %v561, 0.0
    %vm566 = vcmp.ne.f32.partialorder %v558, %v558
    %vm567 = vcmp.ne.f32.partialorder %v561, %v561
    %v568 = vadd.f32 %v558, 0.0
    %v569 = vadd.f32 %v561, 0.0
    %v570 = vand.u32 2147483647, %v558
    %v571 = vand.u32 2147483647, %v561
    %v572 = vsub.f32 0.0, %v570
    %v573 = vsub.f32 0.0, %v571
    %v574 = vmul.f32 %v572, 1.442695
    %v575 = vpow.pop %v574
    %v576 = vmul.f32 %v573, 1.442695
    %v577 = vpow.pop %v576
    %v578 = vadd.f32 %v575, 1.0
    %v579 = vlog2.pop %v578
    %v580 = vmul.f32 %v579, 0.6931472
    %v581 = vmul.f32 -0.5, %v575
    %v582 = vadd.f32 %v581, 1.0
    %v583 = vmul.f32 %v582, %v575
    %v584 = vand.u32 2147483647, %v575
    %vm585 = vcmp.lt.f32.partialorder %v584, 0.0004427343
    %v586 = vsel %vm585, %v583, %v580
    %v587 = vadd.f32 %v577, 1.0
    %v588 = vlog2.pop %v587
    %v589 = vmul.f32 %v588, 0.6931472
    %v590 = vmul.f32 -0.5, %v577
    %v591 = vadd.f32 %v590, 1.0
    %v592 = vmul.f32 %v591, %v577
    %v593 = vand.u32 2147483647, %v577
    %vm594 = vcmp.lt.f32.partialorder %v593, 0.0004427343
    %v595 = vsel %vm594, %v592, %v589
    %v596 = vadd.f32 %v564, %v586
    %v597 = vadd.f32 %v565, %v595
    %v598 = vsel %vm566, %v568, %v596
    %v599 = vsel %vm567, %v569, %v597
    %v600 = vsub.f32 %v598, 0.6931472
    %v601 = vsub.f32 %v599, 0.6931472
    %v602 = vpack.c.bf16 %v601, %v600
    %v603 = vld [vmem:[#allocation10] sm:$0xf]
    %v604 = vld [vmem:[#allocation10 + $0x4] sm:$0xf]
    %v605 = vld [vmem:[#allocation10 + $0x8] sm:$0xf]
    %v606 = vld [vmem:[#allocation10 + $0xc] sm:$0xf]
    %v607 = vld [vmem:[#allocation10 + $0x10] sm:$0xf]
    %v608 = vld [vmem:[#allocation10 + $0x14] sm:$0xf]
    %v609 = vld [vmem:[#allocation10 + $0x18] sm:$0xf]
    %v610 = vld [vmem:[#allocation10 + $0x1c] sm:$0xf]
    %v611 = vld [vmem:[#allocation10 + $0x20] sm:$0xf]
    %v612 = vld [vmem:[#allocation10 + $0x24] sm:$0xf]
    %v613 = vld [vmem:[#allocation10 + $0x28] sm:$0xf]
    %v614 = vld [vmem:[#allocation10 + $0x2c] sm:$0xf]
    %v615 = vld [vmem:[#allocation10 + $0x30] sm:$0xf]
    %v616 = vld [vmem:[#allocation10 + $0x34] sm:$0xf]
    %v617 = vld [vmem:[#allocation10 + $0x38] sm:$0xf]
    %v618 = vld [vmem:[#allocation10 + $0x3c] sm:$0xf]
    %v619 = vld [vmem:[%s8] sm:$0x1]
    %v621 = vlaneseq
    %v622 = vshrl.u32 %v621, 7
    %v623 = vsub.s32 0, %v622
    %v624 = vrot.slane %v619, %v623
    %v642 = vunpack.c.l.b16 %v603
    %v643 = vunpack.c.l.b16 %v604
    %v644 = vunpack.c.l.b16 %v605
    %v645 = vunpack.c.l.b16 %v606
    %v646 = vunpack.c.l.b16 %v607
    %v647 = vunpack.c.l.b16 %v608
    %v648 = vunpack.c.l.b16 %v609
    %v649 = vunpack.c.l.b16 %v610
    %v650 = vunpack.c.l.b16 %v611
    %v651 = vunpack.c.l.b16 %v612
    %v652 = vunpack.c.l.b16 %v613
    %v653 = vunpack.c.l.b16 %v614
    %v654 = vunpack.c.l.b16 %v615
    %v655 = vunpack.c.l.b16 %v616
    %v656 = vunpack.c.l.b16 %v617
    %v657 = vunpack.c.l.b16 %v618
    %v658 = vpack.c.b16 %v643, %v642
    %v659 = vpack.c.b16 %v645, %v644
    %v660 = vpack.c.b16 %v647, %v646
    %v661 = vpack.c.b16 %v649, %v648
    %v662 = vpack.c.b16 %v651, %v650
    %v663 = vpack.c.b16 %v653, %v652
    %v664 = vpack.c.b16 %v655, %v654
    %v665 = vpack.c.b16 %v657, %v656
    %674 = vmatprep.subr.bf16.mxu0 0
    %675 = vmatpush1.bf16.msra.mxu0 %v665
    %676 = vmatprep.subr.bf16.mxu0 0
    %677 = vmatpush1.bf16.msra.mxu0 %v664
    %678 = vmatprep.subr.bf16.mxu0 0
    %679 = vmatpush1.bf16.msra.mxu0 %v663
    %680 = vmatprep.subr.bf16.mxu0 0
    %681 = vmatpush1.bf16.msra.mxu0 %v662
    %682 = vmatprep.subr.bf16.mxu0 0
    %683 = vmatpush1.bf16.msra.mxu0 %v661
    %684 = vmatprep.subr.bf16.mxu0 0
    %685 = vmatpush1.bf16.msra.mxu0 %v660
    %686 = vmatprep.subr.bf16.mxu0 0
    %687 = vmatpush1.bf16.msra.mxu0 %v659
    %688 = vmatprep.subr.bf16.mxu0 0
    %689 = vmatpush1.bf16.msra.mxu0 %v658
    %690 = vmatprep.subr.bf16.mxu0 0
    %691 = vmatpush2.bf16.msra.mxu0 0
    %692 = vmatprep.subr.bf16.mxu0 0
    %693 = vmatpush2.bf16.msra.mxu0 0
    %694 = vmatprep.subr.bf16.mxu0 0
    %695 = vmatpush2.bf16.msra.mxu0 0
    %696 = vmatprep.subr.bf16.mxu0 0
    %697 = vmatpush2.bf16.msra.mxu0 0
    %698 = vmatprep.subr.bf16.mxu0 0
    %699 = vmatpush2.bf16.msra.mxu0 0
    %700 = vmatprep.subr.bf16.mxu0 0
    %701 = vmatpush2.bf16.msra.mxu0 0
    %702 = vmatprep.subr.bf16.mxu0 0
    %703 = vmatpush2.bf16.msra.mxu0 0
    %704 = vmatprep.subr.bf16.mxu0 0
    %705 = vmatpush2.bf16.msra.mxu0 0
    %706 = vmatprep.mubr.bf16.mxu0 0
    %707 = vmatmul.mubr.bf16.gmra.mxu0 %v602
    %v708 = vpop.f32.mrf.mxu0
    %v709 = vadd.f32 %v624, %v708
    %v710 = vpop.f32.mrf.mxu0
    %v711 = vpop.f32.mrf.mxu0
    %v712 = vadd.f32 %v624, %v711
    %v713 = vpop.f32.mrf.mxu0
    %714 = vdwg.mxu0
    %v715 = vpack.c.bf16 %v712, %v709
    %v716 = vld [vmem:[#allocation11] sm:$0xf]
    %v717 = vld [vmem:[#allocation11 + $0x4] sm:$0xf]
    %v718 = vld [vmem:[#allocation11 + $0x8] sm:$0xf]
    %v719 = vld [vmem:[#allocation11 + $0xc] sm:$0xf]
    %v720 = vld [vmem:[#allocation11 + $0x10] sm:$0xf]
    %v721 = vld [vmem:[#allocation11 + $0x14] sm:$0xf]
    %v722 = vld [vmem:[#allocation11 + $0x18] sm:$0xf]
    %v723 = vld [vmem:[#allocation11 + $0x1c] sm:$0xf]
    %v724 = vld [vmem:[#allocation11 + $0x20] sm:$0xf]
    %v725 = vld [vmem:[#allocation11 + $0x24] sm:$0xf]
    %v726 = vld [vmem:[#allocation11 + $0x28] sm:$0xf]
    %v727 = vld [vmem:[#allocation11 + $0x2c] sm:$0xf]
    %v728 = vld [vmem:[#allocation11 + $0x30] sm:$0xf]
    %v729 = vld [vmem:[#allocation11 + $0x34] sm:$0xf]
    %v730 = vld [vmem:[#allocation11 + $0x38] sm:$0xf]
    %v731 = vld [vmem:[#allocation11 + $0x3c] sm:$0xf]
    %v732 = vld [vmem:[%s10] sm:$0x1]
    %v734 = vlaneseq
    %v735 = vshrl.u32 %v734, 7
    %v736 = vsub.s32 0, %v735
    %v737 = vrot.slane %v732, %v736
    %v755 = vunpack.c.l.b16 %v716
    %v756 = vunpack.c.l.b16 %v717
    %v757 = vunpack.c.l.b16 %v718
    %v758 = vunpack.c.l.b16 %v719
    %v759 = vunpack.c.l.b16 %v720
    %v760 = vunpack.c.l.b16 %v721
    %v761 = vunpack.c.l.b16 %v722
    %v762 = vunpack.c.l.b16 %v723
    %v763 = vunpack.c.l.b16 %v724
    %v764 = vunpack.c.l.b16 %v725
    %v765 = vunpack.c.l.b16 %v726
    %v766 = vunpack.c.l.b16 %v727
    %v767 = vunpack.c.l.b16 %v728
    %v768 = vunpack.c.l.b16 %v729
    %v769 = vunpack.c.l.b16 %v730
    %v770 = vunpack.c.l.b16 %v731
    %v771 = vpack.c.b16 %v756, %v755
    %v772 = vpack.c.b16 %v758, %v757
    %v773 = vpack.c.b16 %v760, %v759
    %v774 = vpack.c.b16 %v762, %v761
    %v775 = vpack.c.b16 %v764, %v763
    %v776 = vpack.c.b16 %v766, %v765
    %v777 = vpack.c.b16 %v768, %v767
    %v778 = vpack.c.b16 %v770, %v769
    %787 = vmatprep.subr.bf16.mxu0 0
    %788 = vmatpush1.bf16.msra.mxu0 %v778
    %789 = vmatprep.subr.bf16.mxu0 0
    %790 = vmatpush1.bf16.msra.mxu0 %v777
    %791 = vmatprep.subr.bf16.mxu0 0
    %792 = vmatpush1.bf16.msra.mxu0 %v776
    %793 = vmatprep.subr.bf16.mxu0 0
    %794 = vmatpush1.bf16.msra.mxu0 %v775
    %795 = vmatprep.subr.bf16.mxu0 0
    %796 = vmatpush1.bf16.msra.mxu0 %v774
    %797 = vmatprep.subr.bf16.mxu0 0
    %798 = vmatpush1.bf16.msra.mxu0 %v773
    %799 = vmatprep.subr.bf16.mxu0 0
    %800 = vmatpush1.bf16.msra.mxu0 %v772
    %801 = vmatprep.subr.bf16.mxu0 0
    %802 = vmatpush1.bf16.msra.mxu0 %v771
    %803 = vmatprep.subr.bf16.mxu0 0
    %804 = vmatpush2.bf16.msra.mxu0 0
    %805 = vmatprep.subr.bf16.mxu0 0
    %806 = vmatpush2.bf16.msra.mxu0 0
    %807 = vmatprep.subr.bf16.mxu0 0
    %808 = vmatpush2.bf16.msra.mxu0 0
    %809 = vmatprep.subr.bf16.mxu0 0
    %810 = vmatpush2.bf16.msra.mxu0 0
    %811 = vmatprep.subr.bf16.mxu0 0
    %812 = vmatpush2.bf16.msra.mxu0 0
    %813 = vmatprep.subr.bf16.mxu0 0
    %814 = vmatpush2.bf16.msra.mxu0 0
    %815 = vmatprep.subr.bf16.mxu0 0
    %816 = vmatpush2.bf16.msra.mxu0 0
    %817 = vmatprep.subr.bf16.mxu0 0
    %818 = vmatpush2.bf16.msra.mxu0 0
    %819 = vmatprep.mubr.bf16.mxu0 0
    %820 = vmatmul.mubr.bf16.gmra.mxu0 %v715
    %v821 = vpop.f32.mrf.mxu0
    %v822 = vadd.f32 %v737, %v821
    %v823 = vpop.f32.mrf.mxu0
    %v824 = vpop.f32.mrf.mxu0
    %v825 = vadd.f32 %v737, %v824
    %v826 = vpop.f32.mrf.mxu0
    %827 = vdwg.mxu0
    %v828 = vmax.f32 %v822, 0.0
    %v829 = vmax.f32 %v825, 0.0
    %vm830 = vcmp.ne.f32.partialorder %v822, %v822
    %vm831 = vcmp.ne.f32.partialorder %v825, %v825
    %v832 = vadd.f32 %v822, 0.0
    %v833 = vadd.f32 %v825, 0.0
    %v834 = vand.u32 2147483647, %v822
    %v835 = vand.u32 2147483647, %v825
    %v836 = vsub.f32 0.0, %v834
    %v837 = vsub.f32 0.0, %v835
    %v838 = vmul.f32 %v836, 1.442695
    %v839 = vpow.pop %v838
    %v840 = vmul.f32 %v837, 1.442695
    %v841 = vpow.pop %v840
    %v842 = vadd.f32 %v839, 1.0
    %v843 = vlog2.pop %v842
    %v844 = vmul.f32 %v843, 0.6931472
    %v845 = vmul.f32 -0.5, %v839
    %v846 = vadd.f32 %v845, 1.0
    %v847 = vmul.f32 %v846, %v839
    %v848 = vand.u32 2147483647, %v839
    %vm849 = vcmp.lt.f32.partialorder %v848, 0.0004427343
    %v850 = vsel %vm849, %v847, %v844
    %v851 = vadd.f32 %v841, 1.0
    %v852 = vlog2.pop %v851
    %v853 = vmul.f32 %v852, 0.6931472
    %v854 = vmul.f32 -0.5, %v841
    %v855 = vadd.f32 %v854, 1.0
    %v856 = vmul.f32 %v855, %v841
    %v857 = vand.u32 2147483647, %v841
    %vm858 = vcmp.lt.f32.partialorder %v857, 0.0004427343
    %v859 = vsel %vm858, %v856, %v853
    %v860 = vadd.f32 %v828, %v850
    %v861 = vadd.f32 %v829, %v859
    %v862 = vsel %vm830, %v832, %v860
    %v863 = vsel %vm831, %v833, %v861
    %v864 = vsub.f32 %v862, 0.6931472
    %v865 = vsub.f32 %v863, 0.6931472
    %v866 = vpack.c.bf16 %v865, %v864
    %v867 = vld [vmem:[#allocation13] sm:$0xf]
    %v868 = vld [vmem:[#allocation13 + $0x4] sm:$0xf]
    %v869 = vld [vmem:[#allocation13 + $0x8] sm:$0xf]
    %v870 = vld [vmem:[#allocation13 + $0xc] sm:$0xf]
    %v871 = vld [vmem:[#allocation13 + $0x10] sm:$0xf]
    %v872 = vld [vmem:[#allocation13 + $0x14] sm:$0xf]
    %v873 = vld [vmem:[#allocation13 + $0x18] sm:$0xf]
    %v874 = vld [vmem:[#allocation13 + $0x1c] sm:$0xf]
    %v875 = vld [vmem:[#allocation13 + $0x20] sm:$0xf]
    %v876 = vld [vmem:[#allocation13 + $0x24] sm:$0xf]
    %v877 = vld [vmem:[#allocation13 + $0x28] sm:$0xf]
    %v878 = vld [vmem:[#allocation13 + $0x2c] sm:$0xf]
    %v879 = vld [vmem:[#allocation13 + $0x30] sm:$0xf]
    %v880 = vld [vmem:[#allocation13 + $0x34] sm:$0xf]
    %v881 = vld [vmem:[#allocation13 + $0x38] sm:$0xf]
    %v882 = vld [vmem:[#allocation13 + $0x3c] sm:$0xf]
    %v883 = vld [vmem:[%s12] sm:$0x1]
    %v885 = vlaneseq
    %v886 = vshrl.u32 %v885, 7
    %v887 = vsub.s32 0, %v886
    %v888 = vrot.slane %v883, %v887
    %v906 = vunpack.c.l.b16 %v867
    %v907 = vunpack.c.l.b16 %v868
    %v908 = vunpack.c.l.b16 %v869
    %v909 = vunpack.c.l.b16 %v870
    %v910 = vunpack.c.l.b16 %v871
    %v911 = vunpack.c.l.b16 %v872
    %v912 = vunpack.c.l.b16 %v873
    %v913 = vunpack.c.l.b16 %v874
    %v914 = vunpack.c.l.b16 %v875
    %v915 = vunpack.c.l.b16 %v876
    %v916 = vunpack.c.l.b16 %v877
    %v917 = vunpack.c.l.b16 %v878
    %v918 = vunpack.c.l.b16 %v879
    %v919 = vunpack.c.l.b16 %v880
    %v920 = vunpack.c.l.b16 %v881
    %v921 = vunpack.c.l.b16 %v882
    %v922 = vpack.c.b16 %v907, %v906
    %v923 = vpack.c.b16 %v909, %v908
    %v924 = vpack.c.b16 %v911, %v910
    %v925 = vpack.c.b16 %v913, %v912
    %v926 = vpack.c.b16 %v915, %v914
    %v927 = vpack.c.b16 %v917, %v916
    %v928 = vpack.c.b16 %v919, %v918
    %v929 = vpack.c.b16 %v921, %v920
    %938 = vmatprep.subr.bf16.mxu0 0
    %939 = vmatpush1.bf16.msra.mxu0 %v929
    %940 = vmatprep.subr.bf16.mxu0 0
    %941 = vmatpush1.bf16.msra.mxu0 %v928
    %942 = vmatprep.subr.bf16.mxu0 0
    %943 = vmatpush1.bf16.msra.mxu0 %v927
    %944 = vmatprep.subr.bf16.mxu0 0
    %945 = vmatpush1.bf16.msra.mxu0 %v926
    %946 = vmatprep.subr.bf16.mxu0 0
    %947 = vmatpush1.bf16.msra.mxu0 %v925
    %948 = vmatprep.subr.bf16.mxu0 0
    %949 = vmatpush1.bf16.msra.mxu0 %v924
    %950 = vmatprep.subr.bf16.mxu0 0
    %951 = vmatpush1.bf16.msra.mxu0 %v923
    %952 = vmatprep.subr.bf16.mxu0 0
    %953 = vmatpush1.bf16.msra.mxu0 %v922
    %954 = vmatprep.subr.bf16.mxu0 0
    %955 = vmatpush2.bf16.msra.mxu0 0
    %956 = vmatprep.subr.bf16.mxu0 0
    %957 = vmatpush2.bf16.msra.mxu0 0
    %958 = vmatprep.subr.bf16.mxu0 0
    %959 = vmatpush2.bf16.msra.mxu0 0
    %960 = vmatprep.subr.bf16.mxu0 0
    %961 = vmatpush2.bf16.msra.mxu0 0
    %962 = vmatprep.subr.bf16.mxu0 0
    %963 = vmatpush2.bf16.msra.mxu0 0
    %964 = vmatprep.subr.bf16.mxu0 0
    %965 = vmatpush2.bf16.msra.mxu0 0
    %966 = vmatprep.subr.bf16.mxu0 0
    %967 = vmatpush2.bf16.msra.mxu0 0
    %968 = vmatprep.subr.bf16.mxu0 0
    %969 = vmatpush2.bf16.msra.mxu0 0
    %970 = vmatprep.mubr.bf16.mxu0 0
    %971 = vmatmul.mubr.bf16.gmra.mxu0 %v866
    %v972 = vpop.f32.mrf.mxu0
    %v973 = vadd.f32 %v888, %v972
    %v974 = vpop.f32.mrf.mxu0
    %v975 = vpop.f32.mrf.mxu0
    %v976 = vadd.f32 %v888, %v975
    %v977 = vpop.f32.mrf.mxu0
    %978 = vdwg.mxu0
    %v979 = vpack.c.bf16 %v976, %v973
    %v980 = vld [vmem:[#allocation14] sm:$0xf]
    %v981 = vld [vmem:[#allocation14 + $0x4] sm:$0xf]
    %v982 = vld [vmem:[#allocation14 + $0x8] sm:$0xf]
    %v983 = vld [vmem:[#allocation14 + $0xc] sm:$0xf]
    %v984 = vld [vmem:[#allocation14 + $0x10] sm:$0xf]
    %v985 = vld [vmem:[#allocation14 + $0x14] sm:$0xf]
    %v986 = vld [vmem:[#allocation14 + $0x18] sm:$0xf]
    %v987 = vld [vmem:[#allocation14 + $0x1c] sm:$0xf]
    %v988 = vld [vmem:[#allocation14 + $0x20] sm:$0xf]
    %v989 = vld [vmem:[#allocation14 + $0x24] sm:$0xf]
    %v990 = vld [vmem:[#allocation14 + $0x28] sm:$0xf]
    %v991 = vld [vmem:[#allocation14 + $0x2c] sm:$0xf]
    %v992 = vld [vmem:[#allocation14 + $0x30] sm:$0xf]
    %v993 = vld [vmem:[#allocation14 + $0x34] sm:$0xf]
    %v994 = vld [vmem:[#allocation14 + $0x38] sm:$0xf]
    %v995 = vld [vmem:[#allocation14 + $0x3c] sm:$0xf]
    %v996 = vld [vmem:[%s14] sm:$0x1]
    %v998 = vlaneseq
    %v999 = vshrl.u32 %v998, 7
    %v1000 = vsub.s32 0, %v999
    %v1001 = vrot.slane %v996, %v1000
    %v1019 = vunpack.c.l.b16 %v980
    %v1020 = vunpack.c.l.b16 %v981
    %v1021 = vunpack.c.l.b16 %v982
    %v1022 = vunpack.c.l.b16 %v983
    %v1023 = vunpack.c.l.b16 %v984
    %v1024 = vunpack.c.l.b16 %v985
    %v1025 = vunpack.c.l.b16 %v986
    %v1026 = vunpack.c.l.b16 %v987
    %v1027 = vunpack.c.l.b16 %v988
    %v1028 = vunpack.c.l.b16 %v989
    %v1029 = vunpack.c.l.b16 %v990
    %v1030 = vunpack.c.l.b16 %v991
    %v1031 = vunpack.c.l.b16 %v992
    %v1032 = vunpack.c.l.b16 %v993
    %v1033 = vunpack.c.l.b16 %v994
    %v1034 = vunpack.c.l.b16 %v995
    %v1035 = vpack.c.b16 %v1020, %v1019
    %v1036 = vpack.c.b16 %v1022, %v1021
    %v1037 = vpack.c.b16 %v1024, %v1023
    %v1038 = vpack.c.b16 %v1026, %v1025
    %v1039 = vpack.c.b16 %v1028, %v1027
    %v1040 = vpack.c.b16 %v1030, %v1029
    %v1041 = vpack.c.b16 %v1032, %v1031
    %v1042 = vpack.c.b16 %v1034, %v1033
    %1051 = vmatprep.subr.bf16.mxu0 0
    %1052 = vmatpush1.bf16.msra.mxu0 %v1042
    %1053 = vmatprep.subr.bf16.mxu0 0
    %1054 = vmatpush1.bf16.msra.mxu0 %v1041
    %1055 = vmatprep.subr.bf16.mxu0 0
    %1056 = vmatpush1.bf16.msra.mxu0 %v1040
    %1057 = vmatprep.subr.bf16.mxu0 0
    %1058 = vmatpush1.bf16.msra.mxu0 %v1039
    %1059 = vmatprep.subr.bf16.mxu0 0
    %1060 = vmatpush1.bf16.msra.mxu0 %v1038
    %1061 = vmatprep.subr.bf16.mxu0 0
    %1062 = vmatpush1.bf16.msra.mxu0 %v1037
    %1063 = vmatprep.subr.bf16.mxu0 0
    %1064 = vmatpush1.bf16.msra.mxu0 %v1036
    %1065 = vmatprep.subr.bf16.mxu0 0
    %1066 = vmatpush1.bf16.msra.mxu0 %v1035
    %1067 = vmatprep.subr.bf16.mxu0 0
    %1068 = vmatpush2.bf16.msra.mxu0 0
    %1069 = vmatprep.subr.bf16.mxu0 0
    %1070 = vmatpush2.bf16.msra.mxu0 0
    %1071 = vmatprep.subr.bf16.mxu0 0
    %1072 = vmatpush2.bf16.msra.mxu0 0
    %1073 = vmatprep.subr.bf16.mxu0 0
    %1074 = vmatpush2.bf16.msra.mxu0 0
    %1075 = vmatprep.subr.bf16.mxu0 0
    %1076 = vmatpush2.bf16.msra.mxu0 0
    %1077 = vmatprep.subr.bf16.mxu0 0
    %1078 = vmatpush2.bf16.msra.mxu0 0
    %1079 = vmatprep.subr.bf16.mxu0 0
    %1080 = vmatpush2.bf16.msra.mxu0 0
    %1081 = vmatprep.subr.bf16.mxu0 0
    %1082 = vmatpush2.bf16.msra.mxu0 0
    %1083 = vmatprep.mubr.bf16.mxu0 0
    %1084 = vmatmul.mubr.bf16.gmra.mxu0 %v979
    %v1085 = vpop.f32.mrf.mxu0
    %v1086 = vadd.f32 %v1001, %v1085
    %v1087 = vpop.f32.mrf.mxu0
    %v1088 = vpop.f32.mrf.mxu0
    %v1089 = vadd.f32 %v1001, %v1088
    %v1090 = vpop.f32.mrf.mxu0
    %1091 = vdwg.mxu0
    %v1092 = vmax.f32 %v1086, 0.0
    %v1093 = vmax.f32 %v1089, 0.0
    %vm1094 = vcmp.ne.f32.partialorder %v1086, %v1086
    %vm1095 = vcmp.ne.f32.partialorder %v1089, %v1089
    %v1096 = vadd.f32 %v1086, 0.0
    %v1097 = vadd.f32 %v1089, 0.0
    %v1098 = vand.u32 2147483647, %v1086
    %v1099 = vand.u32 2147483647, %v1089
    %v1100 = vsub.f32 0.0, %v1098
    %v1101 = vsub.f32 0.0, %v1099
    %v1102 = vmul.f32 %v1100, 1.442695
    %v1103 = vpow.pop %v1102
    %v1104 = vmul.f32 %v1101, 1.442695
    %v1105 = vpow.pop %v1104
    %v1106 = vadd.f32 %v1103, 1.0
    %v1107 = vlog2.pop %v1106
    %v1108 = vmul.f32 %v1107, 0.6931472
    %v1109 = vmul.f32 -0.5, %v1103
    %v1110 = vadd.f32 %v1109, 1.0
    %v1111 = vmul.f32 %v1110, %v1103
    %v1112 = vand.u32 2147483647, %v1103
    %vm1113 = vcmp.lt.f32.partialorder %v1112, 0.0004427343
    %v1114 = vsel %vm1113, %v1111, %v1108
    %v1115 = vadd.f32 %v1105, 1.0
    %v1116 = vlog2.pop %v1115
    %v1117 = vmul.f32 %v1116, 0.6931472
    %v1118 = vmul.f32 -0.5, %v1105
    %v1119 = vadd.f32 %v1118, 1.0
    %v1120 = vmul.f32 %v1119, %v1105
    %v1121 = vand.u32 2147483647, %v1105
    %vm1122 = vcmp.lt.f32.partialorder %v1121, 0.0004427343
    %v1123 = vsel %vm1122, %v1120, %v1117
    %v1124 = vadd.f32 %v1092, %v1114
    %v1125 = vadd.f32 %v1093, %v1123
    %v1126 = vsel %vm1094, %v1096, %v1124
    %v1127 = vsel %vm1095, %v1097, %v1125
    %v1128 = vsub.f32 %v1126, 0.6931472
    %v1129 = vsub.f32 %v1127, 0.6931472
    %v1130 = vpack.c.bf16 %v1129, %v1128
    %v1131 = vld [vmem:[#allocation16] sm:$0xf]
    %v1132 = vld [vmem:[#allocation16 + $0x4] sm:$0xf]
    %v1133 = vld [vmem:[#allocation16 + $0x8] sm:$0xf]
    %v1134 = vld [vmem:[#allocation16 + $0xc] sm:$0xf]
    %v1135 = vld [vmem:[#allocation16 + $0x10] sm:$0xf]
    %v1136 = vld [vmem:[#allocation16 + $0x14] sm:$0xf]
    %v1137 = vld [vmem:[#allocation16 + $0x18] sm:$0xf]
    %v1138 = vld [vmem:[#allocation16 + $0x1c] sm:$0xf]
    %v1139 = vld [vmem:[#allocation16 + $0x20] sm:$0xf]
    %v1140 = vld [vmem:[#allocation16 + $0x24] sm:$0xf]
    %v1141 = vld [vmem:[#allocation16 + $0x28] sm:$0xf]
    %v1142 = vld [vmem:[#allocation16 + $0x2c] sm:$0xf]
    %v1143 = vld [vmem:[#allocation16 + $0x30] sm:$0xf]
    %v1144 = vld [vmem:[#allocation16 + $0x34] sm:$0xf]
    %v1145 = vld [vmem:[#allocation16 + $0x38] sm:$0xf]
    %v1146 = vld [vmem:[#allocation16 + $0x3c] sm:$0xf]
    %v1147 = vld [vmem:[%s16] sm:$0x1]
    %v1149 = vlaneseq
    %v1150 = vshrl.u32 %v1149, 7
    %v1151 = vsub.s32 0, %v1150
    %v1152 = vrot.slane %v1147, %v1151
    %v1170 = vunpack.c.l.b16 %v1131
    %v1171 = vunpack.c.l.b16 %v1132
    %v1172 = vunpack.c.l.b16 %v1133
    %v1173 = vunpack.c.l.b16 %v1134
    %v1174 = vunpack.c.l.b16 %v1135
    %v1175 = vunpack.c.l.b16 %v1136
    %v1176 = vunpack.c.l.b16 %v1137
    %v1177 = vunpack.c.l.b16 %v1138
    %v1178 = vunpack.c.l.b16 %v1139
    %v1179 = vunpack.c.l.b16 %v1140
    %v1180 = vunpack.c.l.b16 %v1141
    %v1181 = vunpack.c.l.b16 %v1142
    %v1182 = vunpack.c.l.b16 %v1143
    %v1183 = vunpack.c.l.b16 %v1144
    %v1184 = vunpack.c.l.b16 %v1145
    %v1185 = vunpack.c.l.b16 %v1146
    %v1186 = vpack.c.b16 %v1171, %v1170
    %v1187 = vpack.c.b16 %v1173, %v1172
    %v1188 = vpack.c.b16 %v1175, %v1174
    %v1189 = vpack.c.b16 %v1177, %v1176
    %v1190 = vpack.c.b16 %v1179, %v1178
    %v1191 = vpack.c.b16 %v1181, %v1180
    %v1192 = vpack.c.b16 %v1183, %v1182
    %v1193 = vpack.c.b16 %v1185, %v1184
    %1202 = vmatprep.subr.bf16.mxu0 0
    %1203 = vmatpush1.bf16.msra.mxu0 %v1193
    %1204 = vmatprep.subr.bf16.mxu0 0
    %1205 = vmatpush1.bf16.msra.mxu0 %v1192
    %1206 = vmatprep.subr.bf16.mxu0 0
    %1207 = vmatpush1.bf16.msra.mxu0 %v1191
    %1208 = vmatprep.subr.bf16.mxu0 0
    %1209 = vmatpush1.bf16.msra.mxu0 %v1190
    %1210 = vmatprep.subr.bf16.mxu0 0
    %1211 = vmatpush1.bf16.msra.mxu0 %v1189
    %1212 = vmatprep.subr.bf16.mxu0 0
    %1213 = vmatpush1.bf16.msra.mxu0 %v1188
    %1214 = vmatprep.subr.bf16.mxu0 0
    %1215 = vmatpush1.bf16.msra.mxu0 %v1187
    %1216 = vmatprep.subr.bf16.mxu0 0
    %1217 = vmatpush1.bf16.msra.mxu0 %v1186
    %1218 = vmatprep.subr.bf16.mxu0 0
    %1219 = vmatpush2.bf16.msra.mxu0 0
    %1220 = vmatprep.subr.bf16.mxu0 0
    %1221 = vmatpush2.bf16.msra.mxu0 0
    %1222 = vmatprep.subr.bf16.mxu0 0
    %1223 = vmatpush2.bf16.msra.mxu0 0
    %1224 = vmatprep.subr.bf16.mxu0 0
    %1225 = vmatpush2.bf16.msra.mxu0 0
    %1226 = vmatprep.subr.bf16.mxu0 0
    %1227 = vmatpush2.bf16.msra.mxu0 0
    %1228 = vmatprep.subr.bf16.mxu0 0
    %1229 = vmatpush2.bf16.msra.mxu0 0
    %1230 = vmatprep.subr.bf16.mxu0 0
    %1231 = vmatpush2.bf16.msra.mxu0 0
    %1232 = vmatprep.subr.bf16.mxu0 0
    %1233 = vmatpush2.bf16.msra.mxu0 0
    %1234 = vmatprep.mubr.bf16.mxu0 0
    %1235 = vmatmul.mubr.bf16.gmra.mxu0 %v1130
    %v1236 = vpop.f32.mrf.mxu0
    %v1237 = vadd.f32 %v1152, %v1236
    %v1238 = vpop.f32.mrf.mxu0
    %v1239 = vpop.f32.mrf.mxu0
    %v1240 = vadd.f32 %v1152, %v1239
    %v1241 = vpop.f32.mrf.mxu0
    %1242 = vdwg.mxu0
    %1243 = vst [vmem:[#allocation17] sm:$0xff] %v1237
    %1244 = vst [vmem:[#allocation17 + $0x8] sm:$0xff] %v1240
    // Predicated region
    $region106: #{tpu_custom_call.1} parent=1 // pred_check
      _
    $region107: #{tpu_custom_call.1} parent=1 // pred_check_branch
      %1246 = sbr.rel (0) target = $region109
    $region108: #{tpu_custom_call.1} parent=1 // pred_region
      %s1248 = ssub.s32 256, 256
      %1249 = vsyncadd [#allocation4], %s1248
      %s1250 = sshll.u32 [#allocation17], 4
      %s1251 = int_to_ptr.vmem [resolvable:$true] %s1250
      %1256 = dma.vmem_to_hbm [thread:$0]  %s1251, 256, %s17, [#allocation4], 128, 128, 8
    $region109: #{tpu_custom_call.1} parent=1 // pred_fallthru
      _
    // Predicated region
    $region110: #{tpu_custom_call.1} parent=1 // pred_check
      _
    $region111: #{tpu_custom_call.1} parent=1 // pred_check_branch
      %1258 = sbr.rel (0) target = $region113
    $region112: #{tpu_custom_call.1} parent=1 // pred_region
      %1259 = dma.done [#allocation4], 256
    $region113: #{tpu_custom_call.1} parent=1 // pred_fallthru
      _
    %1260 = vsyncpa [#allocation3], 1
    %1261 = vsyncpa [#allocation6], 1
    %1262 = vsyncpa [#allocation9], 1
    %1263 = vsyncpa [#allocation12], 1
    %1264 = vsyncpa [#allocation15], 1
    %1265 = vsyncpa [#allocation4], 1

</llo_original>
